<compile_context>
chip_gen: v7x
topology: tpu7x:2x2x1
jax: 0.10.0
libtpu: 0.0.40
codegen_flags: <defaults>
</compile_context>

<pallas_src>
import functools
import math

import jax
import jax.numpy as jnp
import numpy as np
from jax.experimental import pallas as pl
from jax.experimental.pallas import tpu as pltpu

SOFTPLUS_SHIFT = math.log(2.0)


def _round_up(x, m):
    return ((x + m - 1) // m) * m


# --------------------------------------------------------------------------
# Fused Pallas kernel: all layers + readout in one grid
# --------------------------------------------------------------------------
def _fused_mpnn_kernel(
    md_ref, mask_ref, v0_ref,
    a_ref, c_ref, w_lin_ref, b_lin_ref,
    w1_ref, b1_ref, w2_ref, b2_ref, onehot_ref,
    u_ref,
    v_mem, acc,
    *, compute_dtype,
):
    l = pl.program_id(0)           # layer index (sequential)
    j = pl.program_id(1)           # source-node tile index (reduction, last)
    num_l = pl.num_programs(0)
    num_j = pl.num_programs(1)

    tj = md_ref.shape[1]           # static j-tile width
    n_pad = v_mem.shape[0]         # static padded node count

    # ---- one-time init of the resident node features
    @pl.when((l == 0) & (j == 0))
    def _init_v():
        v_mem[...] = v0_ref[...]

    # ---- per-layer accumulator reset
    @pl.when(j == 0)
    def _zero_acc():
        acc[...] = jnp.zeros_like(acc)

    # ---- j-tile contribution: affine filter folded into the matmul RHS
    #      acc += (mask*dist) @ (v * a_l) + mask @ (v * c_l)
    if tj == n_pad:
        v_src = v_mem[...]                                 # [TJ, H]
    else:
        start = pl.multiple_of(j * tj, tj)
        v_src = v_mem[pl.ds(start, tj), :]                 # [TJ, H]

    a = a_ref[0]                                           # [1, F]  (F == H)
    c = c_ref[0]                                           # [1, F]
    va = (v_src * a).astype(compute_dtype)
    vc = (v_src * c).astype(compute_dtype)
    acc[...] += (jnp.dot(md_ref[...], va, preferred_element_type=jnp.float32)
                 + jnp.dot(mask_ref[...], vc, preferred_element_type=jnp.float32))

    # ---- layer finalize: single output projection, update resident v
    @pl.when(j == num_j - 1)
    def _finish_layer():
        v_mem[...] = (jnp.dot(acc[...], w_lin_ref[0],
                              preferred_element_type=jnp.float32)
                      + b_lin_ref[0])

    # ---- readout (cal_total) on the very last grid step
    @pl.when((l == num_l - 1) & (j == num_j - 1))
    def _readout():
        v = v_mem[...]
        h = jnp.dot(v, w1_ref[...], preferred_element_type=jnp.float32) + b1_ref[...]
        # numerically stable softplus, shifted by log(2)
        h = jnp.maximum(h, 0.0) + jnp.log(1.0 + jnp.exp(-jnp.abs(h))) - SOFTPLUS_SHIFT
        y = jnp.dot(h, w2_ref[...], preferred_element_type=jnp.float32) + b2_ref[...]
        # scatter-sum over graphs == onehot(batch).T @ y  (pads excluded)
        u_ref[...] = jnp.dot(onehot_ref[...], y, preferred_element_type=jnp.float32)


# --------------------------------------------------------------------------
# Parameters (deterministic synthetic init, shapes from MPNN.__init__)
# --------------------------------------------------------------------------
def init_params(key, *, hidden, filters, gaussians, out_channels, num_layers):
    def xavier(k, shape):
        bound = math.sqrt(6.0 / (shape[-2] + shape[-1]))
        return jax.random.uniform(k, shape, jnp.float32, -bound, bound)

    keys = jax.random.split(key, 9)
    return {
        # Embedding(100, hidden_channels)
        "emb": jax.random.normal(keys[0], (100, hidden), jnp.float32),
        # dist_emb = Linear(1, num_gaussians)   (x @ W form), nonzero bias
        "w_de": xavier(keys[1], (1, gaussians)),
        "b_de": 0.1 * jax.random.normal(keys[2], (1, gaussians), jnp.float32),
        # cal_total (biases reset to zero per the reference module)
        "w1": xavier(keys[3], (hidden, hidden // 2)),
        "b1": jnp.zeros((1, hidden // 2), jnp.float32),
        "w2": xavier(keys[4], (hidden // 2, out_channels)),
        "b2": jnp.zeros((1, out_channels), jnp.float32),
        # per-layer edge-filter net + output projection, stacked over layers
        "w_edge": xavier(keys[5], (num_layers, gaussians, filters)),
        "b_edge": 0.1 * jax.random.normal(keys[6], (num_layers, 1, filters), jnp.float32),
        "w_lin": xavier(keys[7], (num_layers, filters, hidden)),
        "b_lin": 0.01 * jax.random.normal(keys[8], (num_layers, 1, hidden), jnp.float32),
    }


# --------------------------------------------------------------------------
# Tiling heuristic: full VMEM residency when md/mask fit, else a large
# multiple-of-128 j-tile streamed from HBM.
# --------------------------------------------------------------------------
_PAIR_BLOCK_BUDGET = 32 * 1024 * 1024   # md+mask, incl. double buffering


def _choose_tiling(N, itemsize, tile_j):
    n_min = _round_up(max(N, 8), 8)
    if tile_j is not None:
        if tile_j % 128 == 0:
            return _round_up(N, tile_j), tile_j
        # invalid explicit tile -> single full-width block
        return n_min, n_min
    # auto: fully VMEM-resident across layers if the dense pair matrices fit
    if 4 * n_min * n_min * itemsize <= _PAIR_BLOCK_BUDGET:
        return n_min, n_min
    n128 = _round_up(N, 128)
    tj = (_PAIR_BLOCK_BUDGET // (4 * n128 * itemsize)) // 128 * 128
    tj = int(max(128, min(1024, tj)))
    return _round_up(N, tj), tj


# --------------------------------------------------------------------------
# Forward pass: glue (distances / mask / gather / padding) + fused kernel
# --------------------------------------------------------------------------
def mpnn_forward(params, z, pos, batch, *, cutoff, num_layers, num_graphs,
                 matmul_dtype=jnp.float32, tile_j=None):
    N = int(z.shape[0])
    H = params["emb"].shape[1]
    L, _, F = params["w_edge"].shape
    H2 = params["w1"].shape[1]
    O = params["w2"].shape[1]
    assert L == num_layers
    assert F == H, "CFConv-style update requires num_filters == hidden_channels"

    stream_dtype = jnp.bfloat16 if matmul_dtype == jnp.bfloat16 else jnp.float32
    itemsize = jnp.dtype(stream_dtype).itemsize

    n_pad, tile_j = _choose_tiling(N, itemsize, tile_j)
    num_j = n_pad // tile_j
    pad = n_pad - N

    # ---- radius_graph equivalent: dense pairwise distances + adjacency mask
    pos_p = jnp.pad(pos.astype(jnp.float32), ((0, pad), (0, 0)))
    batch_p = jnp.pad(batch, (0, pad), constant_values=-1)
    valid = jnp.arange(n_pad) < N

    diff = pos_p[:, None, :] - pos_p[None, :, :]
    dist = jnp.sqrt(jnp.sum(diff * diff, axis=-1))                    # [Np, Np]
    adj = ((batch_p[:, None] == batch_p[None, :])
           & jnp.logical_not(jnp.eye(n_pad, dtype=bool))
           & (dist <= cutoff)
           & valid[:, None] & valid[None, :])
    mask = adj.astype(jnp.float32)
    md = mask * dist                                                  # precomputed
    mask_s = mask.astype(stream_dtype)
    md_s = md.astype(stream_dtype)

    # init_v: embedding lookup (gather, glue); pad rows zeroed
    v0 = jnp.pad(params["emb"][z].astype(jnp.float32), ((0, pad), (0, 0)))

    # per-layer affine edge filter folded on the host:
    #   filt_ij = dist_ij * a_l + c_l
    a = jnp.einsum("og,lgf->lof", params["w_de"], params["w_edge"])        # [L,1,F]
    c = (jnp.einsum("og,lgf->lof", params["b_de"], params["w_edge"])
         + params["b_edge"])                                               # [L,1,F]

    # scatter-sum replacement (pads have batch == -1 -> excluded)
    onehot_t = (batch_p[None, :]
                == jnp.arange(num_graphs, dtype=batch_p.dtype)[:, None]
                ).astype(jnp.float32)                                      # [B, Np]

    # ---- BlockSpecs
    def const_spec(shape):
        nd = len(shape)
        return pl.BlockSpec(shape, lambda l, j, _nd=nd: (0,) * _nd)

    def layer_spec(shape):
        nd = len(shape)
        return pl.BlockSpec(shape, lambda l, j, _nd=nd: (l,) + (0,) * (_nd - 1))

    in_specs = [
        pl.BlockSpec((n_pad, tile_j), lambda l, j: (0, j)),   # md   (j-tiled)
        pl.BlockSpec((n_pad, tile_j), lambda l, j: (0, j)),   # mask (j-tiled)
        const_spec((n_pad, H)),                               # v0 (resident)
        layer_spec((1, 1, F)),                                # a[l]
        layer_spec((1, 1, F)),                                # c[l]
        layer_spec((1, F, H)),                                # w_lin[l]
        layer_spec((1, 1, H)),                                # b_lin[l]
        const_spec((H, H2)),                                  # w1
        const_spec((1, H2)),                                  # b1
        const_spec((H2, O)),                                  # w2
        const_spec((1, O)),                                   # b2
        const_spec((num_graphs, n_pad)),                      # onehot_t
    ]
    out_specs = pl.BlockSpec((num_graphs, O), lambda l, j: (0, 0))

    # ---- explicit VMEM limit (v5e default scoped VMEM is only 16 MiB)
    vmem_need = (4 * n_pad * tile_j * itemsize            # md + mask, dbl-buffered
                 + 2 * n_pad * H * 4                      # v0
                 + 2 * n_pad * H * 4                      # v_mem + acc scratch
                 + 2 * num_graphs * n_pad * 4             # onehot
                 + (2 << 20))                             # weights + headroom
    vmem_limit = int(min(64 * 1024 * 1024, max(32 * 1024 * 1024, vmem_need)))

    # ---- advisory cost estimate for XLA scheduling around the custom call
    refetch = num_layers if num_j > 1 else 1
    flops = int(
        num_layers * (4 * n_pad * n_pad * H        # md@(v*a) and mask@(v*c)
                      + 2 * n_pad * H * H          # acc @ w_lin
                      + 6 * n_pad * H)             # scaling / bias
        + 2 * n_pad * H * H2 + 2 * n_pad * H2 * O + 2 * num_graphs * n_pad * O)
    transcendentals = int(n_pad * H2)
    bytes_accessed = int(
        refetch * 2 * n_pad * n_pad * itemsize     # md + mask (once if resident)
        + 4 * (n_pad * H + num_graphs * n_pad + num_graphs * O
               + num_layers * (2 * F + F * H + H)
               + H * H2 + H2 + H2 * O + O))

    kernel = functools.partial(_fused_mpnn_kernel, compute_dtype=matmul_dtype)
    u = pl.pallas_call(
        kernel,
        out_shape=jax.ShapeDtypeStruct((num_graphs, O), jnp.float32),
        grid_spec=pltpu.PrefetchScalarGridSpec(
            num_scalar_prefetch=0,
            grid=(num_layers, num_j),              # layers outer, j-reduction last
            in_specs=in_specs,
            out_specs=out_specs,
            scratch_shapes=[
                pltpu.VMEM((n_pad, H), jnp.float32),   # resident node features v
                pltpu.VMEM((n_pad, H), jnp.float32),   # per-layer aggregation acc
            ],
        ),
        compiler_params=pltpu.CompilerParams(
            dimension_semantics=("arbitrary", "arbitrary"),
            vmem_limit_bytes=vmem_limit),
        cost_estimate=pl.CostEstimate(
            flops=flops, transcendentals=transcendentals,
            bytes_accessed=bytes_accessed),
    )(md_s, mask_s, v0, a, c,
      params["w_lin"], params["b_lin"],
      params["w1"], params["b1"], params["w2"], params["b2"],
      onehot_t)
    return u


# --------------------------------------------------------------------------
# Pure-JAX reference (original un-folded formulation) for checking
# --------------------------------------------------------------------------
def mpnn_reference(params, z, pos, batch, *, cutoff, num_layers, num_graphs):
    hp = jax.lax.Precision.HIGHEST
    N = z.shape[0]
    diff = pos[:, None, :] - pos[None, :, :]
    dist = jnp.sqrt(jnp.sum(diff * diff, axis=-1))
    mask = ((batch[:, None] == batch[None, :])
            & jnp.logical_not(jnp.eye(N, dtype=bool))
            & (dist <= cutoff)).astype(jnp.float32)
    e = jnp.dot(dist.reshape(N * N, 1), params["w_de"], precision=hp) + params["b_de"]
    v = params["emb"][z]
    for li in range(num_layers):
        w_edge, b_edge = params["w_edge"][li], params["b_edge"][li]
        w_lin, b_lin = params["w_lin"][li], params["b_lin"][li]
        filt = (jnp.dot(e, w_edge, precision=hp) + b_edge).reshape(N, N, -1)
        msg = filt * v[None, :, :] * mask[:, :, None]
        agg = jnp.sum(msg, axis=1)
        v = jnp.dot(agg, w_lin, precision=hp) + b_lin
    h = jnp.dot(v, params["w1"], precision=hp) + params["b1"]
    h = jax.nn.softplus(h) - SOFTPLUS_SHIFT
    y = jnp.dot(h, params["w2"], precision=hp) + params["b2"]
    onehot_t = (batch[None, :]
                == jnp.arange(num_graphs, dtype=batch.dtype)[:, None]).astype(jnp.float32)
    return jnp.dot(onehot_t, y, precision=hp)


# --------------------------------------------------------------------------
if __name__ == "__main__":
    key = jax.random.PRNGKey(0)
    kz1, kp1, kparam, kz2, kp2 = jax.random.split(key, 5)

    hidden, filters, gaussians, out_channels, num_layers = 32, 32, 8, 1, 6
    cutoff = 10.0

    params = init_params(kparam, hidden=hidden, filters=filters,
                         gaussians=gaussians, out_channels=out_channels,
                         num_layers=num_layers)

    def check(name, u, u_ref, rtol):
        u = np.asarray(jax.block_until_ready(u))
        u_ref = np.asarray(jax.block_until_ready(u_ref))
        assert np.all(np.isfinite(u)), name
        atol = rtol * max(1.0, float(np.max(np.abs(u_ref))))
        assert np.allclose(u, u_ref, rtol=rtol, atol=atol), (name, u, u_ref)

    # --- case 1: small graph (N=16, B=2), auto tiling -> fully resident, f32
    N1, B1 = 16, 2
    z1 = jax.random.randint(kz1, (N1,), 0, 100, dtype=jnp.int32)
    pos1 = jax.random.uniform(kp1, (N1, 3), jnp.float32, minval=-1.0, maxval=1.0)
    batch1 = jnp.concatenate([jnp.zeros(N1 // 2, jnp.int32), jnp.ones(N1 // 2, jnp.int32)])
    u1 = mpnn_forward(params, z1, pos1, batch1, cutoff=cutoff,
                      num_layers=num_layers, num_graphs=B1)
    r1 = mpnn_reference(params, z1, pos1, batch1, cutoff=cutoff,
                        num_layers=num_layers, num_graphs=B1)
    assert u1.shape == (B1, out_channels)
    check("small_f32", u1, r1, rtol=2e-2)

    # --- case 2: larger graph, auto tiling (md/mask VMEM-resident across layers)
    N2, B2 = 256, 2
    z2 = jax.random.randint(kz2, (N2,), 0, 100, dtype=jnp.int32)
    pos2 = jax.random.uniform(kp2, (N2, 3), jnp.float32, minval=-1.0, maxval=1.0)
    batch2 = jnp.concatenate([jnp.zeros(N2 // 2, jnp.int32), jnp.ones(N2 // 2, jnp.int32)])
    u2 = mpnn_forward(params, z2, pos2, batch2, cutoff=cutoff,
                      num_layers=num_layers, num_graphs=B2)
    r2 = mpnn_reference(params, z2, pos2, batch2, cutoff=cutoff,
                        num_layers=num_layers, num_graphs=B2)
    check("resident_f32", u2, r2, rtol=2e-2)

    # --- case 3: explicit tile_j=128 exercising the streamed j-reduction grid
    u3 = mpnn_forward(params, z2, pos2, batch2, cutoff=cutoff,
                      num_layers=num_layers, num_graphs=B2, tile_j=128)
    check("tiled_f32", u3, r2, rtol=5e-2)

    # --- case 4: bf16 MXU operands / bf16 HBM stream, f32 accumulation
    u4 = mpnn_forward(params, z2, pos2, batch2, cutoff=cutoff,
                      num_layers=num_layers, num_graphs=B2, tile_j=128,
                      matmul_dtype=jnp.bfloat16)
    check("tiled_bf16", u4, r2, rtol=2e-1)

    print("KERNEL_OK")
</pallas_src>

<mosaic_0001>
module attributes {stable_mosaic.version = 11 : i64} {
  func.func @_fused_mpnn_kernel(%arg0: i32, %arg1: i32, %arg2: memref<16x16xf32, #tpu.memory_space<vmem>>, %arg3: memref<16x16xf32, #tpu.memory_space<vmem>>, %arg4: memref<16x32xf32, #tpu.memory_space<vmem>>, %arg5: memref<1x1x32xf32, #tpu.memory_space<vmem>>, %arg6: memref<1x1x32xf32, #tpu.memory_space<vmem>>, %arg7: memref<1x32x32xf32, #tpu.memory_space<vmem>>, %arg8: memref<1x1x32xf32, #tpu.memory_space<vmem>>, %arg9: memref<32x16xf32, #tpu.memory_space<vmem>>, %arg10: memref<1x16xf32, #tpu.memory_space<vmem>>, %arg11: memref<16x1xf32, #tpu.memory_space<vmem>>, %arg12: memref<1x1xf32, #tpu.memory_space<vmem>>, %arg13: memref<2x16xf32, #tpu.memory_space<vmem>>, %arg14: memref<2x1xf32, #tpu.memory_space<vmem>>, %arg15: memref<16x32xf32, #tpu.memory_space<vmem>>, %arg16: memref<16x32xf32, #tpu.memory_space<vmem>>) attributes {dimension_semantics = [#tpu.dimension_semantics<arbitrary>, #tpu.dimension_semantics<arbitrary>], iteration_bounds = array<i64: 6, 1>, scalar_prefetch = 0 : i64, scratch_operands = 2 : i64, tpu.core_type = #tpu.core_type<tc>, window_params = [{transform_indices = @transform_0, window_bounds = array<i64: 16, 16>}, {transform_indices = @transform_1, window_bounds = array<i64: 16, 16>}, {pipeline_mode = #tpu.pipeline_mode<synchronous>, transform_indices = @transform_2, window_bounds = array<i64: 16, 32>}, {transform_indices = @transform_3, window_bounds = array<i64: 1, 1, 32>}, {transform_indices = @transform_4, window_bounds = array<i64: 1, 1, 32>}, {transform_indices = @transform_5, window_bounds = array<i64: 1, 32, 32>}, {transform_indices = @transform_6, window_bounds = array<i64: 1, 1, 32>}, {pipeline_mode = #tpu.pipeline_mode<synchronous>, transform_indices = @transform_7, window_bounds = array<i64: 32, 16>}, {pipeline_mode = #tpu.pipeline_mode<synchronous>, transform_indices = @transform_8, window_bounds = array<i64: 1, 16>}, {pipeline_mode = #tpu.pipeline_mode<synchronous>, transform_indices = @transform_9, window_bounds = array<i64: 16, 1>}, {pipeline_mode = #tpu.pipeline_mode<synchronous>, transform_indices = @transform_10, window_bounds = array<i64: 1, 1>}, {pipeline_mode = #tpu.pipeline_mode<synchronous>, transform_indices = @transform_11, window_bounds = array<i64: 2, 16>}, {pipeline_mode = #tpu.pipeline_mode<synchronous>, transform_indices = @transform_12, window_bounds = array<i64: 2, 1>}]} {
    %c0_i32 = arith.constant 0 : i32
    %0 = arith.cmpi eq, %arg0, %c0_i32 : i32
    %c0_i32_0 = arith.constant 0 : i32
    %1 = arith.cmpi eq, %arg1, %c0_i32_0 : i32
    %2 = arith.andi %0, %1 : i1
    %3 = arith.extui %2 : i1 to i32
    %c0_i32_1 = arith.constant 0 : i32
    %4 = arith.cmpi ne, %3, %c0_i32_1 : i32
    scf.if %4 {
      %c0_24 = arith.constant 0 : index
      %c0_25 = arith.constant 0 : index
      %33 = vector.load %arg4[%c0_24, %c0_25] : memref<16x32xf32, #tpu.memory_space<vmem>>, vector<16x32xf32>
      %c0_26 = arith.constant 0 : index
      %c0_27 = arith.constant 0 : index
      %34 = vector.load %arg15[%c0_26, %c0_27] : memref<16x32xf32, #tpu.memory_space<vmem>>, vector<16x32xf32>
      tpu.vector_store %arg15[%c0_26, %c0_27], %33 {strides = array<i32>} : memref<16x32xf32, #tpu.memory_space<vmem>>, vector<16x32xf32>,
    } else {
    }
    %c0_i32_2 = arith.constant 0 : i32
    %5 = arith.cmpi eq, %arg1, %c0_i32_2 : i32
    %6 = arith.extui %5 : i1 to i32
    %c0_i32_3 = arith.constant 0 : i32
    %7 = arith.cmpi ne, %6, %c0_i32_3 : i32
    scf.if %7 {
      %cst_24 = arith.constant 0.000000e+00 : f32
      %33 = vector.broadcast %cst_24 : f32 to vector<16x32xf32>
      %c0_25 = arith.constant 0 : index
      %c0_26 = arith.constant 0 : index
      %34 = vector.load %arg16[%c0_25, %c0_26] : memref<16x32xf32, #tpu.memory_space<vmem>>, vector<16x32xf32>
      tpu.vector_store %arg16[%c0_25, %c0_26], %33 {strides = array<i32>} : memref<16x32xf32, #tpu.memory_space<vmem>>, vector<16x32xf32>,
    } else {
    }
    %c0 = arith.constant 0 : index
    %c0_4 = arith.constant 0 : index
    %8 = vector.load %arg15[%c0, %c0_4] : memref<16x32xf32, #tpu.memory_space<vmem>>, vector<16x32xf32>
    %c0_5 = arith.constant 0 : index
    %c0_6 = arith.constant 0 : index
    %c0_7 = arith.constant 0 : index
    %9 = vector.load %arg5[%c0_5, %c0_6, %c0_7] : memref<1x1x32xf32, #tpu.memory_space<vmem>>, vector<1x1x32xf32>
    %10 = vector.shape_cast %9 : vector<1x1x32xf32> to vector<1x32xf32>
    %c0_8 = arith.constant 0 : index
    %c0_9 = arith.constant 0 : index
    %c0_10 = arith.constant 0 : index
    %11 = vector.load %arg6[%c0_8, %c0_9, %c0_10] : memref<1x1x32xf32, #tpu.memory_space<vmem>>, vector<1x1x32xf32>
    %12 = vector.shape_cast %11 : vector<1x1x32xf32> to vector<1x32xf32>
    %13 = vector.broadcast %10 : vector<1x32xf32> to vector<16x32xf32>
    %14 = arith.mulf %8, %13 : vector<16x32xf32>
    %15 = vector.broadcast %12 : vector<1x32xf32> to vector<16x32xf32>
    %16 = arith.mulf %8, %15 : vector<16x32xf32>
    %c0_11 = arith.constant 0 : index
    %c0_12 = arith.constant 0 : index
    %17 = vector.load %arg16[%c0_11, %c0_12] : memref<16x32xf32, #tpu.memory_space<vmem>>, vector<16x32xf32>
    %c0_13 = arith.constant 0 : index
    %c0_14 = arith.constant 0 : index
    %18 = vector.load %arg2[%c0_13, %c0_14] : memref<16x16xf32, #tpu.memory_space<vmem>>, vector<16x16xf32>
    %cst = arith.constant dense<0.000000e+00> : vector<16x32xf32>
    %19 = tpu.matmul %18, %14, %cst {dimension_numbers = #tpu.dot_dimension_numbers<[1], [0], [0], [1], [0, 0, 1, 1], [], []>} : vector<16x16xf32>, vector<16x32xf32>, vector<16x32xf32> -> vector<16x32xf32>
    %c0_15 = arith.constant 0 : index
    %c0_16 = arith.constant 0 : index
    %20 = vector.load %arg3[%c0_15, %c0_16] : memref<16x16xf32, #tpu.memory_space<vmem>>, vector<16x16xf32>
    %cst_17 = arith.constant dense<0.000000e+00> : vector<16x32xf32>
    %21 = tpu.matmul %20, %16, %cst_17 {dimension_numbers = #tpu.dot_dimension_numbers<[1], [0], [0], [1], [0, 0, 1, 1], [], []>} : vector<16x16xf32>, vector<16x32xf32>, vector<16x32xf32> -> vector<16x32xf32>
    %22 = arith.addf %19, %21 : vector<16x32xf32>
    %23 = arith.addf %17, %22 : vector<16x32xf32>
    %c0_18 = arith.constant 0 : index
    %c0_19 = arith.constant 0 : index
    %24 = vector.load %arg16[%c0_18, %c0_19] : memref<16x32xf32, #tpu.memory_space<vmem>>, vector<16x32xf32>
    tpu.vector_store %arg16[%c0_18, %c0_19], %23 {strides = array<i32>} : memref<16x32xf32, #tpu.memory_space<vmem>>, vector<16x32xf32>,
    %c0_i32_20 = arith.constant 0 : i32
    %25 = arith.cmpi eq, %arg1, %c0_i32_20 : i32
    %26 = arith.extui %25 : i1 to i32
    %c0_i32_21 = arith.constant 0 : i32
    %27 = arith.cmpi ne, %26, %c0_i32_21 : i32
    scf.if %27 {
      %c0_24 = arith.constant 0 : index
      %c0_25 = arith.constant 0 : index
      %33 = vector.load %arg16[%c0_24, %c0_25] : memref<16x32xf32, #tpu.memory_space<vmem>>, vector<16x32xf32>
      %c0_26 = arith.constant 0 : index
      %c0_27 = arith.constant 0 : index
      %c0_28 = arith.constant 0 : index
      %34 = vector.load %arg7[%c0_26, %c0_27, %c0_28] : memref<1x32x32xf32, #tpu.memory_space<vmem>>, vector<1x32x32xf32>
      %35 = vector.shape_cast %34 : vector<1x32x32xf32> to vector<32x32xf32>
      %cst_29 = arith.constant dense<0.000000e+00> : vector<16x32xf32>
      %36 = tpu.matmul %33, %35, %cst_29 {dimension_numbers = #tpu.dot_dimension_numbers<[1], [0], [0], [1], [0, 0, 1, 1], [], []>} : vector<16x32xf32>, vector<32x32xf32>, vector<16x32xf32> -> vector<16x32xf32>
      %c0_30 = arith.constant 0 : index
      %c0_31 = arith.constant 0 : index
      %c0_32 = arith.constant 0 : index
      %37 = vector.load %arg8[%c0_30, %c0_31, %c0_32] : memref<1x1x32xf32, #tpu.memory_space<vmem>>, vector<1x1x32xf32>
      %38 = vector.shape_cast %37 : vector<1x1x32xf32> to vector<1x32xf32>
      %39 = vector.broadcast %38 : vector<1x32xf32> to vector<16x32xf32>
      %40 = arith.addf %36, %39 : vector<16x32xf32>
      %c0_33 = arith.constant 0 : index
      %c0_34 = arith.constant 0 : index
      %41 = vector.load %arg15[%c0_33, %c0_34] : memref<16x32xf32, #tpu.memory_space<vmem>>, vector<16x32xf32>
      tpu.vector_store %arg15[%c0_33, %c0_34], %40 {strides = array<i32>} : memref<16x32xf32, #tpu.memory_space<vmem>>, vector<16x32xf32>,
    } else {
    }
    %c5_i32 = arith.constant 5 : i32
    %28 = arith.cmpi eq, %arg0, %c5_i32 : i32
    %c0_i32_22 = arith.constant 0 : i32
    %29 = arith.cmpi eq, %arg1, %c0_i32_22 : i32
    %30 = arith.andi %28, %29 : i1
    %31 = arith.extui %30 : i1 to i32
    %c0_i32_23 = arith.constant 0 : i32
    %32 = arith.cmpi ne, %31, %c0_i32_23 : i32
    scf.if %32 {
      %c0_24 = arith.constant 0 : index
      %c0_25 = arith.constant 0 : index
      %33 = vector.load %arg15[%c0_24, %c0_25] : memref<16x32xf32, #tpu.memory_space<vmem>>, vector<16x32xf32>
      %c0_26 = arith.constant 0 : index
      %c0_27 = arith.constant 0 : index
      %34 = vector.load %arg9[%c0_26, %c0_27] : memref<32x16xf32, #tpu.memory_space<vmem>>, vector<32x16xf32>
      %cst_28 = arith.constant dense<0.000000e+00> : vector<16x16xf32>
      %35 = tpu.matmul %33, %34, %cst_28 {dimension_numbers = #tpu.dot_dimension_numbers<[1], [0], [0], [1], [0, 0, 1, 1], [], []>} : vector<16x32xf32>, vector<32x16xf32>, vector<16x16xf32> -> vector<16x16xf32>
      %c0_29 = arith.constant 0 : index
      %c0_30 = arith.constant 0 : index
      %36 = vector.load %arg10[%c0_29, %c0_30] : memref<1x16xf32, #tpu.memory_space<vmem>>, vector<1x16xf32>
      %37 = vector.broadcast %36 : vector<1x16xf32> to vector<16x16xf32>
      %38 = arith.addf %35, %37 : vector<16x16xf32>
      %cst_31 = arith.constant 0.000000e+00 : f32
      %39 = vector.broadcast %cst_31 : f32 to vector<16x16xf32>
      %40 = arith.maximumf %38, %39 : vector<16x16xf32>
      %41 = math.absf %38 : vector<16x16xf32>
      %cst_32 = arith.constant 0.000000e+00 : f32
      %42 = vector.broadcast %cst_32 : f32 to vector<16x16xf32>
      %43 = arith.subf %42, %41 : vector<16x16xf32>
      %44 = math.exp %43 : vector<16x16xf32>
      %cst_33 = arith.constant 1.000000e+00 : f32
      %45 = vector.broadcast %cst_33 : f32 to vector<16x16xf32>
      %46 = arith.addf %45, %44 : vector<16x16xf32>
      %47 = math.log %46 : vector<16x16xf32>
      %48 = arith.addf %40, %47 : vector<16x16xf32>
      %cst_34 = arith.constant 0.693147182 : f32
      %49 = vector.broadcast %cst_34 : f32 to vector<16x16xf32>
      %50 = arith.subf %48, %49 : vector<16x16xf32>
      %c0_35 = arith.constant 0 : index
      %c0_36 = arith.constant 0 : index
      %51 = vector.load %arg11[%c0_35, %c0_36] : memref<16x1xf32, #tpu.memory_space<vmem>>, vector<16x1xf32>
      %cst_37 = arith.constant dense<0.000000e+00> : vector<16x1xf32>
      %52 = tpu.matmul %50, %51, %cst_37 {dimension_numbers = #tpu.dot_dimension_numbers<[1], [0], [0], [1], [0, 0, 1, 1], [], []>} : vector<16x16xf32>, vector<16x1xf32>, vector<16x1xf32> -> vector<16x1xf32>
      %c0_38 = arith.constant 0 : index
      %c0_39 = arith.constant 0 : index
      %53 = vector.load %arg12[%c0_38, %c0_39] : memref<1x1xf32, #tpu.memory_space<vmem>>, vector<1x1xf32>
      %54 = vector.broadcast %53 : vector<1x1xf32> to vector<16x1xf32>
      %55 = arith.addf %52, %54 : vector<16x1xf32>
      %c0_40 = arith.constant 0 : index
      %c0_41 = arith.constant 0 : index
      %56 = vector.load %arg13[%c0_40, %c0_41] : memref<2x16xf32, #tpu.memory_space<vmem>>, vector<2x16xf32>
      %cst_42 = arith.constant dense<0.000000e+00> : vector<2x1xf32>
      %57 = tpu.matmul %56, %55, %cst_42 {dimension_numbers = #tpu.dot_dimension_numbers<[1], [0], [0], [1], [0, 0, 1, 1], [], []>} : vector<2x16xf32>, vector<16x1xf32>, vector<2x1xf32> -> vector<2x1xf32>
      %c0_43 = arith.constant 0 : index
      %c0_44 = arith.constant 0 : index
      %58 = vector.load %arg14[%c0_43, %c0_44] : memref<2x1xf32, #tpu.memory_space<vmem>>, vector<2x1xf32>
      tpu.vector_store %arg14[%c0_43, %c0_44], %57 {strides = array<i32>} : memref<2x1xf32, #tpu.memory_space<vmem>>, vector<2x1xf32>,
    } else {
    }
    return
  }
  func.func @transform_0(%arg0: i32, %arg1: i32) -> (i32, i32) {
    %c0_i32 = arith.constant 0 : i32
    %c0_i32_0 = arith.constant 0 : i32
    return %c0_i32, %arg1 : i32, i32
  }
  func.func @transform_1(%arg0: i32, %arg1: i32) -> (i32, i32) {
    %c0_i32 = arith.constant 0 : i32
    %c0_i32_0 = arith.constant 0 : i32
    return %c0_i32, %arg1 : i32, i32
  }
  func.func @transform_2(%arg0: i32, %arg1: i32) -> (i32, i32) {
    %c0_i32 = arith.constant 0 : i32
    %c0_i32_0 = arith.constant 0 : i32
    %c0_i32_1 = arith.constant 0 : i32
    return %c0_i32, %c0_i32_0 : i32, i32
  }
  func.func @transform_3(%arg0: i32, %arg1: i32) -> (i32, i32, i32) {
    %c0_i32 = arith.constant 0 : i32
    %c0_i32_0 = arith.constant 0 : i32
    %c0_i32_1 = arith.constant 0 : i32
    return %arg0, %c0_i32, %c0_i32_0 : i32, i32, i32
  }
  func.func @transform_4(%arg0: i32, %arg1: i32) -> (i32, i32, i32) {
    %c0_i32 = arith.constant 0 : i32
    %c0_i32_0 = arith.constant 0 : i32
    %c0_i32_1 = arith.constant 0 : i32
    return %arg0, %c0_i32, %c0_i32_0 : i32, i32, i32
  }
  func.func @transform_5(%arg0: i32, %arg1: i32) -> (i32, i32, i32) {
    %c0_i32 = arith.constant 0 : i32
    %c0_i32_0 = arith.constant 0 : i32
    %c0_i32_1 = arith.constant 0 : i32
    return %arg0, %c0_i32, %c0_i32_0 : i32, i32, i32
  }
  func.func @transform_6(%arg0: i32, %arg1: i32) -> (i32, i32, i32) {
    %c0_i32 = arith.constant 0 : i32
    %c0_i32_0 = arith.constant 0 : i32
    %c0_i32_1 = arith.constant 0 : i32
    return %arg0, %c0_i32, %c0_i32_0 : i32, i32, i32
  }
  func.func @transform_7(%arg0: i32, %arg1: i32) -> (i32, i32) {
    %c0_i32 = arith.constant 0 : i32
    %c0_i32_0 = arith.constant 0 : i32
    %c0_i32_1 = arith.constant 0 : i32
    return %c0_i32, %c0_i32_0 : i32, i32
  }
  func.func @transform_8(%arg0: i32, %arg1: i32) -> (i32, i32) {
    %c0_i32 = arith.constant 0 : i32
    %c0_i32_0 = arith.constant 0 : i32
    %c0_i32_1 = arith.constant 0 : i32
    return %c0_i32, %c0_i32_0 : i32, i32
  }
  func.func @transform_9(%arg0: i32, %arg1: i32) -> (i32, i32) {
    %c0_i32 = arith.constant 0 : i32
    %c0_i32_0 = arith.constant 0 : i32
    %c0_i32_1 = arith.constant 0 : i32
    return %c0_i32, %c0_i32_0 : i32, i32
  }
  func.func @transform_10(%arg0: i32, %arg1: i32) -> (i32, i32) {
    %c0_i32 = arith.constant 0 : i32
    %c0_i32_0 = arith.constant 0 : i32
    %c0_i32_1 = arith.constant 0 : i32
    return %c0_i32, %c0_i32_0 : i32, i32
  }
  func.func @transform_11(%arg0: i32, %arg1: i32) -> (i32, i32) {
    %c0_i32 = arith.constant 0 : i32
    %c0_i32_0 = arith.constant 0 : i32
    %c0_i32_1 = arith.constant 0 : i32
    return %c0_i32, %c0_i32_0 : i32, i32
  }
  func.func @transform_12(%arg0: i32, %arg1: i32) -> (i32, i32) {
    %c0_i32 = arith.constant 0 : i32
    %c0_i32_0 = arith.constant 0 : i32
    %c0_i32_1 = arith.constant 0 : i32
    return %c0_i32, %c0_i32_0 : i32, i32
  }
}

</mosaic_0001>

<llo_original>
// kernel: tpu_custom_call.1
$region0: #{tpu_custom_call.1}
  #allocation0 [shape = 'u32[]', space=smem, size = 0x4, offset = 0x4, fixed_abs, tag = 'smem constant byte address 0x4 - core index']
  #allocation1 [shape = 'u32[144,128]{1,0:T(1,128)}', space=vmem, size = 0x12000, scoped, tag = 'internal scratch']
  #allocation2 [shape = 'f32[16,32]{1,0:T(8,128)}', space=vmem, size = 0x2000, scoped, tag = 'scratch operand']
  #allocation3 [shape = 'f32[16,32]{1,0:T(8,128)}', space=vmem, size = 0x2000, scoped, tag = 'scratch operand']
  #allocation4 [shape = 'f32[1,1]{1,0:T(1,128)S(1)}', space=vmem, size = 0x200, scoped, tag = 'scoped memory for tpu_custom_call.1']
  %s0 = inlined_call_operand.vmem [shape: f32[16,16], index: 0, kind: input, shape index: {}]
  %s1 = inlined_call_operand.vmem [shape: f32[16,16], index: 1, kind: input, shape index: {}]
  %s2 = inlined_call_operand.vmem [shape: f32[16,32], index: 2, kind: input, shape index: {}]
  %s3 = inlined_call_operand.vmem [shape: f32[6,1,32], index: 3, kind: input, shape index: {}]
  %s4 = inlined_call_operand.vmem [shape: f32[6,1,32], index: 4, kind: input, shape index: {}]
  %s5 = inlined_call_operand.hbm [shape: f32[6,32,32], index: 5, kind: input, shape index: {}]
  %s6 = inlined_call_operand.vmem [shape: f32[6,1,32], index: 6, kind: input, shape index: {}]
  %s7 = inlined_call_operand.vmem [shape: f32[32,16], index: 7, kind: input, shape index: {}]
  %s8 = inlined_call_operand.vmem [shape: f32[1,16], index: 8, kind: input, shape index: {}]
  %s9 = inlined_call_operand.vmem [shape: f32[16,1], index: 9, kind: input, shape index: {}]
  %s10 = inlined_call_operand.<no memory space> [shape: f32[1,1], index: 10, kind: input, shape index: {}]
  %s11 = inlined_call_operand.vmem [shape: f32[2,16], index: 11, kind: input, shape index: {}]
  %s12 = inlined_call_operand.vmem [shape: f32[2,1], index: 12, kind: output, shape index: {}]
  %s13 = sld [smem:[#allocation0]]
  $region101: #{tpu_custom_call.1} parent=0
    _
  %s15 = ssub.s32 1, %s13
  %s16 = scalar_select 0, %s15, %s13
  %v17 = vstv %s10
  %18 = vst [vmem:[#allocation4] sm:$0x1] %v17
  $region1: #{tpu_custom_call.1} parent=0
    #allocation5 [shape = 'u8[32768]{0}', space=vmem, size = 0x8000, scoped, tag = 'input window, operand 5']
    #allocation6 [shape = 's32[2]{0}', space=sflag, size = 0x8, scoped, tag = 'scoped memory for tpu_custom_call.1']
    %19 = vsyncpa [#allocation6], 0
    %s20 = scalar_lea.sflag [#allocation6], 1
    %21 = vsyncpa %s20, 0
    loop: start=0, step=1, limit=8
    $region2: #{tpu_custom_call.1} parent=1 // loop_pre_header
      _
    $region3: #{tpu_custom_call.1} parent=1 // loop_header
      %s23 = sphi 0, %s27
      %p24 = scmp.ge.s32.totalorder %s23, 8
      %s30 = sphi 0, %s42
      %s31 = sphi 0, %s38
      %s32 = sphi 0, %s30
      %s33 = sphi 0, %s31
      %s34 = sphi 0, %s32
      %s35 = sphi 0, %s33
      %s45 = sphi 0, %s47
      %s48 = sphi 0, %s45
      %s49 = sphi 0, %s48
      %s65 = sphi 0, %s49
      %s71 = sphi 0, %s73
      %s74 = sphi 0, %s71
      %s75 = sphi 0, %s74
      %s91 = sphi 0, %s75
      %s95 = sphi 0, %s95
      %s97 = sphi 0, %s95
      %s98 = sphi 0, %s97
      %s112 = sphi 0, %s98
      %s118 = sphi 0, %s120
      %s121 = sphi 0, %s118
      %s122 = sphi 0, %s121
      %s138 = sphi 0, %s122
      %s144 = sphi 0, %s146
      %s147 = sphi 0, %s144
      %s148 = sphi 0, %s147
      %s164 = sphi 0, %s148
      %s170 = sphi 0, %s172
      %s173 = sphi 0, %s170
      %s174 = sphi 0, %s173
      %s190 = sphi 0, %s174
      %s196 = sphi 0, %s198
      %s199 = sphi 0, %s196
      %s200 = sphi 0, %s199
      %s216 = sphi 0, %s200
      %s220 = sphi 0, %s220
      %s222 = sphi 0, %s220
      %s223 = sphi 0, %s222
      %s237 = sphi 0, %s223
      %s241 = sphi 0, %s241
      %s243 = sphi 0, %s241
      %s244 = sphi 0, %s243
      %s258 = sphi 0, %s244
      %s262 = sphi 0, %s262
      %s264 = sphi 0, %s262
      %s265 = sphi 0, %s264
      %s279 = sphi 0, %s265
      %s283 = sphi 0, %s283
      %s285 = sphi 0, %s283
      %s286 = sphi 0, %s285
      %s300 = sphi 0, %s286
      %s304 = sphi 0, %s304
      %s306 = sphi 0, %s304
      %s307 = sphi 0, %s306
      %s321 = sphi 0, %s307
      %s325 = sphi 0, %s325
      %s327 = sphi 0, %s325
      %s328 = sphi 0, %s327
      %s342 = sphi 0, %s328
    $region4: #{tpu_custom_call.1} parent=1 // loop_header_branch
      %26 = sbr.rel (%p24) target = $region8
    $region5: #{tpu_custom_call.1} parent=1 // loop_body
      %s28 = ssub.s32 %s23, 1
      %s29 = ssub.s32 %s23, 2
      %s36 = sadd.s32 1, %s31
      %p37 = scmp.ge.s32.totalorder %s36, 1
      %s38 = scalar_select %p37, 0, %s36
      %s39 = sadd.s32 1, %s30
      %s40 = scalar_select %p37, %s39, %s30
      %p41 = scmp.ge.s32.totalorder %s40, 6
      %s42 = scalar_select %p41, 0, %s40
      %s43 = ssub.s32 %s31, %s38
      %p44 = scmp.eq.s32.totalorder %s43, 0
      %s46 = sadd.s32 %s45, 1
      %s47 = scalar_select %p44, %s45, %s46
      %p50 = pneg %p44
      %p51 = scmp.eq.s32.totalorder %s23, 5
      %p52 = por %p50, %p51
      %p53 = scmp.ne.s32.totalorder %s45, %s48
      %p54 = scmp.eq.s32.totalorder %s23, 0
      %p55 = por %p53, %p54
      %p56 = scmp.ne.s32.totalorder %s45, %s48
      %p57 = scmp.eq.s32.totalorder %s28, 5
      %p58 = por %p56, %p57
      %p59 = scmp.ne.s32.totalorder %s48, %s49
      %p60 = scmp.eq.s32.totalorder %s28, 0
      %p61 = por %p59, %p60
      %p62 = scmp.ne.s32.totalorder %s48, %s49
      %p63 = scmp.eq.s32.totalorder %s29, 5
      %p64 = por %p62, %p63
      %p66 = scmp.ne.s32.totalorder %s49, %s65
      %p67 = scmp.eq.s32.totalorder %s29, 0
      %p68 = por %p66, %p67
      %s69 = ssub.s32 %s31, %s38
      %p70 = scmp.eq.s32.totalorder %s69, 0
      %s72 = sadd.s32 %s71, 1
      %s73 = scalar_select %p70, %s71, %s72
      %p76 = pneg %p70
      %p77 = scmp.eq.s32.totalorder %s23, 5
      %p78 = por %p76, %p77
      %p79 = scmp.ne.s32.totalorder %s71, %s74
      %p80 = scmp.eq.s32.totalorder %s23, 0
      %p81 = por %p79, %p80
      %p82 = scmp.ne.s32.totalorder %s71, %s74
      %p83 = scmp.eq.s32.totalorder %s28, 5
      %p84 = por %p82, %p83
      %p85 = scmp.ne.s32.totalorder %s74, %s75
      %p86 = scmp.eq.s32.totalorder %s28, 0
      %p87 = por %p85, %p86
      %p88 = scmp.ne.s32.totalorder %s74, %s75
      %p89 = scmp.eq.s32.totalorder %s29, 5
      %p90 = por %p88, %p89
      %p92 = scmp.ne.s32.totalorder %s75, %s91
      %p93 = scmp.eq.s32.totalorder %s29, 0
      %p94 = por %p92, %p93
      %s96 = sadd.s32 %s95, 1
      %p99 = scmp.eq.s32.totalorder %s23, 5
      %p100 = scmp.ne.s32.totalorder %s95, %s97
      %p101 = scmp.eq.s32.totalorder %s23, 0
      %p102 = por %p100, %p101
      %p103 = scmp.ne.s32.totalorder %s95, %s97
      %p104 = scmp.eq.s32.totalorder %s28, 5
      %p105 = por %p103, %p104
      %p106 = scmp.ne.s32.totalorder %s97, %s98
      %p107 = scmp.eq.s32.totalorder %s28, 0
      %p108 = por %p106, %p107
      %p109 = scmp.ne.s32.totalorder %s97, %s98
      %p110 = scmp.eq.s32.totalorder %s29, 5
      %p111 = por %p109, %p110
      %p113 = scmp.ne.s32.totalorder %s98, %s112
      %p114 = scmp.eq.s32.totalorder %s29, 0
      %p115 = por %p113, %p114
      %s116 = ssub.s32 %s30, %s42
      %p117 = scmp.eq.s32.totalorder %s116, 0
      %s119 = sadd.s32 %s118, 1
      %s120 = scalar_select %p117, %s118, %s119
      %p123 = pneg %p117
      %p124 = scmp.eq.s32.totalorder %s23, 5
      %p125 = por %p123, %p124
      %p126 = scmp.ne.s32.totalorder %s118, %s121
      %p127 = scmp.eq.s32.totalorder %s23, 0
      %p128 = por %p126, %p127
      %p129 = scmp.ne.s32.totalorder %s118, %s121
      %p130 = scmp.eq.s32.totalorder %s28, 5
      %p131 = por %p129, %p130
      %p132 = scmp.ne.s32.totalorder %s121, %s122
      %p133 = scmp.eq.s32.totalorder %s28, 0
      %p134 = por %p132, %p133
      %p135 = scmp.ne.s32.totalorder %s121, %s122
      %p136 = scmp.eq.s32.totalorder %s29, 5
      %p137 = por %p135, %p136
      %p139 = scmp.ne.s32.totalorder %s122, %s138
      %p140 = scmp.eq.s32.totalorder %s29, 0
      %p141 = por %p139, %p140
      %s142 = ssub.s32 %s30, %s42
      %p143 = scmp.eq.s32.totalorder %s142, 0
      %s145 = sadd.s32 %s144, 1
      %s146 = scalar_select %p143, %s144, %s145
      %p149 = pneg %p143
      %p150 = scmp.eq.s32.totalorder %s23, 5
      %p151 = por %p149, %p150
      %p152 = scmp.ne.s32.totalorder %s144, %s147
      %p153 = scmp.eq.s32.totalorder %s23, 0
      %p154 = por %p152, %p153
      %p155 = scmp.ne.s32.totalorder %s144, %s147
      %p156 = scmp.eq.s32.totalorder %s28, 5
      %p157 = por %p155, %p156
      %p158 = scmp.ne.s32.totalorder %s147, %s148
      %p159 = scmp.eq.s32.totalorder %s28, 0
      %p160 = por %p158, %p159
      %p161 = scmp.ne.s32.totalorder %s147, %s148
      %p162 = scmp.eq.s32.totalorder %s29, 5
      %p163 = por %p161, %p162
      %p165 = scmp.ne.s32.totalorder %s148, %s164
      %p166 = scmp.eq.s32.totalorder %s29, 0
      %p167 = por %p165, %p166
      %s168 = ssub.s32 %s30, %s42
      %p169 = scmp.eq.s32.totalorder %s168, 0
      %s171 = sadd.s32 %s170, 1
      %s172 = scalar_select %p169, %s170, %s171
      %p175 = pneg %p169
      %p176 = scmp.eq.s32.totalorder %s23, 5
      %p177 = por %p175, %p176
      %p178 = scmp.ne.s32.totalorder %s170, %s173
      %p179 = scmp.eq.s32.totalorder %s23, 0
      %p180 = por %p178, %p179
      %p181 = scmp.ne.s32.totalorder %s170, %s173
      %p182 = scmp.eq.s32.totalorder %s28, 5
      %p183 = por %p181, %p182
      %p184 = scmp.ne.s32.totalorder %s173, %s174
      %p185 = scmp.eq.s32.totalorder %s28, 0
      %p186 = por %p184, %p185
      %p187 = scmp.ne.s32.totalorder %s173, %s174
      %p188 = scmp.eq.s32.totalorder %s29, 5
      %p189 = por %p187, %p188
      %p191 = scmp.ne.s32.totalorder %s174, %s190
      %p192 = scmp.eq.s32.totalorder %s29, 0
      %p193 = por %p191, %p192
      %s194 = ssub.s32 %s30, %s42
      %p195 = scmp.eq.s32.totalorder %s194, 0
      %s197 = sadd.s32 %s196, 1
      %s198 = scalar_select %p195, %s196, %s197
      %p201 = pneg %p195
      %p202 = scmp.eq.s32.totalorder %s23, 5
      %p203 = por %p201, %p202
      %p204 = scmp.ne.s32.totalorder %s196, %s199
      %p205 = scmp.eq.s32.totalorder %s23, 0
      %p206 = por %p204, %p205
      %p207 = scmp.ne.s32.totalorder %s196, %s199
      %p208 = scmp.eq.s32.totalorder %s28, 5
      %p209 = por %p207, %p208
      %p210 = scmp.ne.s32.totalorder %s199, %s200
      %p211 = scmp.eq.s32.totalorder %s28, 0
      %p212 = por %p210, %p211
      %p213 = scmp.ne.s32.totalorder %s199, %s200
      %p214 = scmp.eq.s32.totalorder %s29, 5
      %p215 = por %p213, %p214
      %p217 = scmp.ne.s32.totalorder %s200, %s216
      %p218 = scmp.eq.s32.totalorder %s29, 0
      %p219 = por %p217, %p218
      %s221 = sadd.s32 %s220, 1
      %p224 = scmp.eq.s32.totalorder %s23, 5
      %p225 = scmp.ne.s32.totalorder %s220, %s222
      %p226 = scmp.eq.s32.totalorder %s23, 0
      %p227 = por %p225, %p226
      %p228 = scmp.ne.s32.totalorder %s220, %s222
      %p229 = scmp.eq.s32.totalorder %s28, 5
      %p230 = por %p228, %p229
      %p231 = scmp.ne.s32.totalorder %s222, %s223
      %p232 = scmp.eq.s32.totalorder %s28, 0
      %p233 = por %p231, %p232
      %p234 = scmp.ne.s32.totalorder %s222, %s223
      %p235 = scmp.eq.s32.totalorder %s29, 5
      %p236 = por %p234, %p235
      %p238 = scmp.ne.s32.totalorder %s223, %s237
      %p239 = scmp.eq.s32.totalorder %s29, 0
      %p240 = por %p238, %p239
      %s242 = sadd.s32 %s241, 1
      %p245 = scmp.eq.s32.totalorder %s23, 5
      %p246 = scmp.ne.s32.totalorder %s241, %s243
      %p247 = scmp.eq.s32.totalorder %s23, 0
      %p248 = por %p246, %p247
      %p249 = scmp.ne.s32.totalorder %s241, %s243
      %p250 = scmp.eq.s32.totalorder %s28, 5
      %p251 = por %p249, %p250
      %p252 = scmp.ne.s32.totalorder %s243, %s244
      %p253 = scmp.eq.s32.totalorder %s28, 0
      %p254 = por %p252, %p253
      %p255 = scmp.ne.s32.totalorder %s243, %s244
      %p256 = scmp.eq.s32.totalorder %s29, 5
      %p257 = por %p255, %p256
      %p259 = scmp.ne.s32.totalorder %s244, %s258
      %p260 = scmp.eq.s32.totalorder %s29, 0
      %p261 = por %p259, %p260
      %s263 = sadd.s32 %s262, 1
      %p266 = scmp.eq.s32.totalorder %s23, 5
      %p267 = scmp.ne.s32.totalorder %s262, %s264
      %p268 = scmp.eq.s32.totalorder %s23, 0
      %p269 = por %p267, %p268
      %p270 = scmp.ne.s32.totalorder %s262, %s264
      %p271 = scmp.eq.s32.totalorder %s28, 5
      %p272 = por %p270, %p271
      %p273 = scmp.ne.s32.totalorder %s264, %s265
      %p274 = scmp.eq.s32.totalorder %s28, 0
      %p275 = por %p273, %p274
      %p276 = scmp.ne.s32.totalorder %s264, %s265
      %p277 = scmp.eq.s32.totalorder %s29, 5
      %p278 = por %p276, %p277
      %p280 = scmp.ne.s32.totalorder %s265, %s279
      %p281 = scmp.eq.s32.totalorder %s29, 0
      %p282 = por %p280, %p281
      %s284 = sadd.s32 %s283, 1
      %p287 = scmp.eq.s32.totalorder %s23, 5
      %p288 = scmp.ne.s32.totalorder %s283, %s285
      %p289 = scmp.eq.s32.totalorder %s23, 0
      %p290 = por %p288, %p289
      %p291 = scmp.ne.s32.totalorder %s283, %s285
      %p292 = scmp.eq.s32.totalorder %s28, 5
      %p293 = por %p291, %p292
      %p294 = scmp.ne.s32.totalorder %s285, %s286
      %p295 = scmp.eq.s32.totalorder %s28, 0
      %p296 = por %p294, %p295
      %p297 = scmp.ne.s32.totalorder %s285, %s286
      %p298 = scmp.eq.s32.totalorder %s29, 5
      %p299 = por %p297, %p298
      %p301 = scmp.ne.s32.totalorder %s286, %s300
      %p302 = scmp.eq.s32.totalorder %s29, 0
      %p303 = por %p301, %p302
      %s305 = sadd.s32 %s304, 1
      %p308 = scmp.eq.s32.totalorder %s23, 5
      %p309 = scmp.ne.s32.totalorder %s304, %s306
      %p310 = scmp.eq.s32.totalorder %s23, 0
      %p311 = por %p309, %p310
      %p312 = scmp.ne.s32.totalorder %s304, %s306
      %p313 = scmp.eq.s32.totalorder %s28, 5
      %p314 = por %p312, %p313
      %p315 = scmp.ne.s32.totalorder %s306, %s307
      %p316 = scmp.eq.s32.totalorder %s28, 0
      %p317 = por %p315, %p316
      %p318 = scmp.ne.s32.totalorder %s306, %s307
      %p319 = scmp.eq.s32.totalorder %s29, 5
      %p320 = por %p318, %p319
      %p322 = scmp.ne.s32.totalorder %s307, %s321
      %p323 = scmp.eq.s32.totalorder %s29, 0
      %p324 = por %p322, %p323
      %s326 = sadd.s32 %s325, 1
      %p329 = scmp.eq.s32.totalorder %s23, 5
      %p330 = scmp.ne.s32.totalorder %s325, %s327
      %p331 = scmp.eq.s32.totalorder %s23, 0
      %p332 = por %p330, %p331
      %p333 = scmp.ne.s32.totalorder %s325, %s327
      %p334 = scmp.eq.s32.totalorder %s28, 5
      %p335 = por %p333, %p334
      %p336 = scmp.ne.s32.totalorder %s327, %s328
      %p337 = scmp.eq.s32.totalorder %s28, 0
      %p338 = por %p336, %p337
      %p339 = scmp.ne.s32.totalorder %s327, %s328
      %p340 = scmp.eq.s32.totalorder %s29, 5
      %p341 = por %p339, %p340
      %p343 = scmp.ne.s32.totalorder %s328, %s342
      %p344 = scmp.eq.s32.totalorder %s29, 0
      %p345 = por %p343, %p344
      %p346 = scmp.le.s32.totalorder 1, %s23
      %p347 = scmp.lt.s32.totalorder %s23, 7
      %p348 = pnand %p346, %p347
      %p349 = pneg %p348
      // Predicated region
      $region9: #{tpu_custom_call.1} parent=5 // pred_check
        _
      $region10: #{tpu_custom_call.1} parent=5 // pred_check_branch
        %351 = sbr.rel (%p348) target = $region12
      $region11: #{tpu_custom_call.1} parent=5 // pred_region
        %s352 = ssub.s32 %s23, 1
        // Predicated region
        $region13: #{tpu_custom_call.1} parent=11 // pred_check
          %p353 = pneg %p61
        $region14: #{tpu_custom_call.1} parent=11 // pred_check_branch
          %355 = sbr.rel (%p353) target = $region16
        $region15: #{tpu_custom_call.1} parent=11 // pred_region
          %p356 = scmp.lt.s32.totalorder %s33, 0
          %s357 = scalar_select %p356, %s33, 0
          %s358 = smul.addr %s357, 8
          %s359 = scalar_lea.vmem %s0, %s358
        $region16: #{tpu_custom_call.1} parent=11 // pred_fallthru
          _
        // Predicated region
        $region17: #{tpu_custom_call.1} parent=11 // pred_check
          %p360 = pneg %p87
        $region18: #{tpu_custom_call.1} parent=11 // pred_check_branch
          %362 = sbr.rel (%p360) target = $region20
        $region19: #{tpu_custom_call.1} parent=11 // pred_region
          %p363 = scmp.lt.s32.totalorder %s33, 0
          %s364 = scalar_select %p363, %s33, 0
          %s365 = smul.addr %s364, 8
          %s366 = scalar_lea.vmem %s1, %s365
        $region20: #{tpu_custom_call.1} parent=11 // pred_fallthru
          _
        // Predicated region
        $region21: #{tpu_custom_call.1} parent=11 // pred_check
          %p367 = pneg %p108
        $region22: #{tpu_custom_call.1} parent=11 // pred_check_branch
          %369 = sbr.rel (%p367) target = $region24
        $region23: #{tpu_custom_call.1} parent=11 // pred_region
          _
        $region24: #{tpu_custom_call.1} parent=11 // pred_fallthru
          _
        // Predicated region
        $region25: #{tpu_custom_call.1} parent=11 // pred_check
          %p370 = pneg %p233
        $region26: #{tpu_custom_call.1} parent=11 // pred_check_branch
          %372 = sbr.rel (%p370) target = $region28
        $region27: #{tpu_custom_call.1} parent=11 // pred_region
          _
        $region28: #{tpu_custom_call.1} parent=11 // pred_fallthru
          _
        // Predicated region
        $region29: #{tpu_custom_call.1} parent=11 // pred_check
          %p373 = pneg %p254
        $region30: #{tpu_custom_call.1} parent=11 // pred_check_branch
          %375 = sbr.rel (%p373) target = $region32
        $region31: #{tpu_custom_call.1} parent=11 // pred_region
          _
        $region32: #{tpu_custom_call.1} parent=11 // pred_fallthru
          _
        // Predicated region
        $region33: #{tpu_custom_call.1} parent=11 // pred_check
          %p376 = pneg %p275
        $region34: #{tpu_custom_call.1} parent=11 // pred_check_branch
          %378 = sbr.rel (%p376) target = $region36
        $region35: #{tpu_custom_call.1} parent=11 // pred_region
          _
        $region36: #{tpu_custom_call.1} parent=11 // pred_fallthru
          _
        // Predicated region
        $region37: #{tpu_custom_call.1} parent=11 // pred_check
          %p379 = pneg %p296
        $region38: #{tpu_custom_call.1} parent=11 // pred_check_branch
          %381 = sbr.rel (%p379) target = $region40
        $region39: #{tpu_custom_call.1} parent=11 // pred_region
          _
        $region40: #{tpu_custom_call.1} parent=11 // pred_fallthru
          _
        // Predicated region
        $region41: #{tpu_custom_call.1} parent=11 // pred_check
          %p382 = pneg %p317
        $region42: #{tpu_custom_call.1} parent=11 // pred_check_branch
          %384 = sbr.rel (%p382) target = $region44
        $region43: #{tpu_custom_call.1} parent=11 // pred_region
          _
        $region44: #{tpu_custom_call.1} parent=11 // pred_fallthru
          _
      $region12: #{tpu_custom_call.1} parent=5 // pred_fallthru
        _
      %p385 = scmp.lt.s32.totalorder %s23, 6
      // Predicated region
      $region45: #{tpu_custom_call.1} parent=5 // pred_check
        %p386 = pneg %p385
      $region46: #{tpu_custom_call.1} parent=5 // pred_check_branch
        %388 = sbr.rel (%p386) target = $region48
      $region47: #{tpu_custom_call.1} parent=5 // pred_region
        // Predicated region
        $region49: #{tpu_custom_call.1} parent=47 // pred_check
          %p389 = pneg %p128
        $region50: #{tpu_custom_call.1} parent=47 // pred_check_branch
          %391 = sbr.rel (%p389) target = $region52
        $region51: #{tpu_custom_call.1} parent=47 // pred_region
          %p392 = scmp.lt.s32.totalorder %s30, 5
          %s393 = scalar_select %p392, %s30, 5
          %s394 = scalar_lea.vmem %s3, %s393
        $region52: #{tpu_custom_call.1} parent=47 // pred_fallthru
          _
        // Predicated region
        $region53: #{tpu_custom_call.1} parent=47 // pred_check
          %p395 = pneg %p154
        $region54: #{tpu_custom_call.1} parent=47 // pred_check_branch
          %397 = sbr.rel (%p395) target = $region56
        $region55: #{tpu_custom_call.1} parent=47 // pred_region
          %p398 = scmp.lt.s32.totalorder %s30, 5
          %s399 = scalar_select %p398, %s30, 5
          %s400 = scalar_lea.vmem %s4, %s399
        $region56: #{tpu_custom_call.1} parent=47 // pred_fallthru
          _
        // Predicated region
        $region57: #{tpu_custom_call.1} parent=47 // pred_check
          %p401 = pneg %p180
        $region58: #{tpu_custom_call.1} parent=47 // pred_check_branch
          %403 = sbr.rel (%p401) target = $region60
        $region59: #{tpu_custom_call.1} parent=47 // pred_region
          %s404 = sand.u32 %s170, 1
          %s405 = scalar_lea.sflag [#allocation6], %s404
          %s406 = sand.u32 %s170, 1
          %s407 = smul.addr %s406, 32
          %s408 = scalar_lea.vmem [#allocation5], %s407
          %s410 = ssub.s32 512, 512
          %411 = vsyncadd %s405, %s410
          %s412 = smul.addr %s30, 4
          %s413 = smul.addr %s412, 128
          %s414 = scalar_lea.hbm %s5, %s413
          %s415 = sshll.u32 %s408, 4
          %s416 = int_to_ptr.vmem [resolvable:$true] %s415
          %421 = dma.hbm_to_vmem [thread:$0]  %s414, 512, %s416, %s405, 128, 128, 8
        $region60: #{tpu_custom_call.1} parent=47 // pred_fallthru
          _
        // Predicated region
        $region61: #{tpu_custom_call.1} parent=47 // pred_check
          %p422 = pneg %p206
        $region62: #{tpu_custom_call.1} parent=47 // pred_check_branch
          %424 = sbr.rel (%p422) target = $region64
        $region63: #{tpu_custom_call.1} parent=47 // pred_region
          %p425 = scmp.lt.s32.totalorder %s30, 5
          %s426 = scalar_select %p425, %s30, 5
          %s427 = scalar_lea.vmem %s6, %s426
        $region64: #{tpu_custom_call.1} parent=47 // pred_fallthru
          _
      $region48: #{tpu_custom_call.1} parent=5 // pred_fallthru
        _
      %p428 = scmp.le.s32.totalorder 1, %s23
      %p429 = scmp.lt.s32.totalorder %s23, 7
      %p430 = pnand %p428, %p429
      %p431 = pneg %p430
      // Predicated region
      $region65: #{tpu_custom_call.1} parent=5 // pred_check
        _
      $region66: #{tpu_custom_call.1} parent=5 // pred_check_branch
        %433 = sbr.rel (%p430) target = $region68
      $region67: #{tpu_custom_call.1} parent=5 // pred_region
        %s434 = ssub.s32 %s23, 1
        %s435 = sand.u32 %s173, 1
        %s436 = scalar_lea.sflag [#allocation6], %s435
        %s437 = sand.u32 %s173, 1
        %s438 = smul.addr %s437, 32
        %s439 = scalar_lea.vmem [#allocation5], %s438
        // Predicated region
        $region69: #{tpu_custom_call.1} parent=67 // pred_check
          %p440 = pneg %p186
        $region70: #{tpu_custom_call.1} parent=67 // pred_check_branch
          %442 = sbr.rel (%p440) target = $region72
        $region71: #{tpu_custom_call.1} parent=67 // pred_region
          %443 = dma.done %s436, 512
        $region72: #{tpu_custom_call.1} parent=67 // pred_fallthru
          _
        %p444 = scmp.lt.s32.totalorder %s33, 0
        %s445 = scalar_select %p444, %s33, 0
        %s446 = smul.addr %s445, 8
        %s447 = scalar_lea.vmem %s0, %s446
        %p448 = pneg %p61
        %p449 = pneg %p58
        %p450 = scmp.lt.s32.totalorder %s33, 0
        %s451 = scalar_select %p450, %s33, 0
        %s452 = smul.addr %s451, 8
        %s453 = scalar_lea.vmem %s1, %s452
        %p454 = pneg %p87
        %p455 = pneg %p84
        %p456 = pneg %p108
        %p457 = pneg %p105
        %p458 = scmp.lt.s32.totalorder %s32, 5
        %s459 = scalar_select %p458, %s32, 5
        %s460 = scalar_lea.vmem %s3, %s459
        %p461 = pneg %p134
        %p462 = pneg %p131
        %p463 = scmp.lt.s32.totalorder %s32, 5
        %s464 = scalar_select %p463, %s32, 5
        %s465 = scalar_lea.vmem %s4, %s464
        %p466 = pneg %p160
        %p467 = pneg %p157
        %s468 = sand.u32 %s173, 1
        %s469 = scalar_lea.sflag [#allocation6], %s468
        %s470 = sand.u32 %s173, 1
        %s471 = smul.addr %s470, 32
        %s472 = scalar_lea.vmem [#allocation5], %s471
        %p473 = pneg %p186
        %p474 = pneg %p183
        %p475 = scmp.lt.s32.totalorder %s32, 5
        %s476 = scalar_select %p475, %s32, 5
        %s477 = scalar_lea.vmem %s6, %s476
        %p478 = pneg %p212
        %p479 = pneg %p209
        %p480 = pneg %p233
        %p481 = pneg %p230
        %p482 = pneg %p254
        %p483 = pneg %p251
        %p484 = pneg %p275
        %p485 = pneg %p272
        %p486 = pneg %p296
        %p487 = pneg %p293
        %p488 = pneg %p317
        %p489 = pneg %p314
        %p490 = pneg %p338
        %p491 = pneg %p335
        %p492 = scmp.lt.s32.totalorder %s33, 0
        %s493 = scalar_select %p492, %s33, 0
        %s494 = smul.addr %s493, 8
        %s495 = scalar_lea.vmem %s0, %s494
        %p496 = scmp.lt.s32.totalorder %s33, 0
        %s497 = scalar_select %p496, %s33, 0
        %s498 = smul.addr %s497, 8
        %s499 = scalar_lea.vmem %s1, %s498
        %p500 = scmp.lt.s32.totalorder %s32, 5
        %s501 = scalar_select %p500, %s32, 5
        %s502 = scalar_lea.vmem %s3, %s501
        %p503 = scmp.lt.s32.totalorder %s32, 5
        %s504 = scalar_select %p503, %s32, 5
        %s505 = scalar_lea.vmem %s4, %s504
        %p506 = scmp.lt.s32.totalorder %s32, 5
        %s507 = scalar_select %p506, %s32, 5
        %s508 = scalar_lea.vmem %s6, %s507
        %p509 = scmp.eq.s32.totalorder %s32, 0
        %p510 = scmp.eq.s32.totalorder %s33, 0
        %p511 = pnand %p509, %p510
        %p512 = pneg %p511
        // Predicated region
        $region73: #{tpu_custom_call.1} parent=67 // pred_check
          _
        $region74: #{tpu_custom_call.1} parent=67 // pred_check_branch
          %514 = sbr.rel (%p511) target = $region76
        $region75: #{tpu_custom_call.1} parent=67 // pred_region
          %v515 = vld [vmem:[%s2] sm:$0xff]
          %v516 = vld [vmem:[%s2 + $0x8] sm:$0xff]
          %vm517 = vcmask 261120
          %518 = vst.msk [vmem:[#allocation2] sm:$0xff] %vm517, %v515
          %519 = vst.msk [vmem:[#allocation2 + $0x8] sm:$0xff] %vm517, %v516
        $region76: #{tpu_custom_call.1} parent=67 // pred_fallthru
          _
        // Predicated region
        $region77: #{tpu_custom_call.1} parent=67 // pred_check
          %p520 = pneg %p510
        $region78: #{tpu_custom_call.1} parent=67 // pred_check_branch
          %522 = sbr.rel (%p520) target = $region80
        $region79: #{tpu_custom_call.1} parent=67 // pred_region
          %vm523 = vcmask 261120
          %524 = vst.msk [vmem:[#allocation3] sm:$0xff] %vm523, 0.0
          %525 = vst.msk [vmem:[#allocation3 + $0x8] sm:$0xff] %vm523, 0.0
        $region80: #{tpu_custom_call.1} parent=67 // pred_fallthru
          _
        %v526 = vld [vmem:[#allocation2] sm:$0xff]
        %v527 = vld [vmem:[#allocation2 + $0x8] sm:$0xff]
        %v528 = vld [vmem:[%s502] sm:$0x1]
        %v529 = vld [vmem:[%s505] sm:$0x1]
        %v531 = vlaneseq
        %v532 = vshrl.u32 %v531, 7
        %v533 = vsub.s32 0, %v532
        %v534 = vrot.slane %v528, %v533
        %v536 = vmul.f32 %v526, %v534
        %v537 = vmul.f32 %v527, %v534
        %v539 = vlaneseq
        %v540 = vshrl.u32 %v539, 7
        %v541 = vsub.s32 0, %v540
        %v542 = vrot.slane %v529, %v541
        %v544 = vmul.f32 %v526, %v542
        %v545 = vmul.f32 %v527, %v542
        %v546 = vld [vmem:[#allocation3] sm:$0xff]
        %v547 = vld [vmem:[#allocation3 + $0x8] sm:$0xff]
        %v548 = vld [vmem:[%s495] sm:$0xff]
        %v549 = vld [vmem:[%s495 + $0x8] sm:$0xff]
        %v550 = vld [vmem:[%s499] sm:$0xff]
        %v551 = vld [vmem:[%s499 + $0x8] sm:$0xff]
        %vm552 = vcmask 130048
        %v554 = vsel %vm552, %v550, 0
        %v557 = vsel %vm552, %v551, 0
        %559 = vmatprep.subr.mxu0 0.0
        %560 = vmatpush1.msra.mxu0 %v544
        %561 = vmatprep.subr.mxu0 0.0
        %562 = vmatpush1.msra.mxu0 %v545
        %563 = vmatprep.subr.mxu0 0.0
        %564 = vmatpush1.msra.mxu0 0.0
        %565 = vmatprep.subr.mxu0 0.0
        %566 = vmatpush1.msra.mxu0 0.0
        %567 = vmatprep.subr.mxu0 0.0
        %568 = vmatpush1.msra.mxu0 0.0
        %569 = vmatprep.subr.mxu0 0.0
        %570 = vmatpush1.msra.mxu0 0.0
        %571 = vmatprep.subr.mxu0 0.0
        %572 = vmatpush1.msra.mxu0 0.0
        %573 = vmatprep.subr.mxu0 0.0
        %574 = vmatpush1.msra.mxu0 0.0
        %575 = vmatprep.subr.mxu0 0.0
        %576 = vmatpush1.msra.mxu0 0.0
        %577 = vmatprep.subr.mxu0 0.0
        %578 = vmatpush1.msra.mxu0 0.0
        %579 = vmatprep.subr.mxu0 0.0
        %580 = vmatpush1.msra.mxu0 0.0
        %581 = vmatprep.subr.mxu0 0.0
        %582 = vmatpush1.msra.mxu0 0.0
        %583 = vmatprep.subr.mxu0 0.0
        %584 = vmatpush1.msra.mxu0 0.0
        %585 = vmatprep.subr.mxu0 0.0
        %586 = vmatpush1.msra.mxu0 0.0
        %587 = vmatprep.subr.mxu0 0.0
        %588 = vmatpush1.msra.mxu0 0.0
        %589 = vmatprep.subr.mxu0 0.0
        %590 = vmatpush1.msra.mxu0 0.0
        %591 = vmatprep.subr.mxu0 0.0
        %592 = vmatpush1.msra.mxu0 0.0
        %593 = vmatprep.subr.mxu0 0.0
        %594 = vmatpush1.msra.mxu0 0.0
        %595 = vmatprep.subr.mxu0 0.0
        %596 = vmatpush1.msra.mxu0 0.0
        %597 = vmatprep.subr.mxu0 0.0
        %598 = vmatpush1.msra.mxu0 0.0
        %599 = vmatprep.subr.mxu0 0.0
        %600 = vmatpush1.msra.mxu0 0.0
        %601 = vmatprep.subr.mxu0 0.0
        %602 = vmatpush1.msra.mxu0 0.0
        %603 = vmatprep.subr.mxu0 0.0
        %604 = vmatpush1.msra.mxu0 0.0
        %605 = vmatprep.subr.mxu0 0.0
        %606 = vmatpush1.msra.mxu0 0.0
        %607 = vmatprep.subr.mxu0 0.0
        %608 = vmatpush1.msra.mxu0 0.0
        %609 = vmatprep.subr.mxu0 0.0
        %610 = vmatpush1.msra.mxu0 0.0
        %611 = vmatprep.subr.mxu0 0.0
        %612 = vmatpush1.msra.mxu0 0.0
        %613 = vmatprep.subr.mxu0 0.0
        %614 = vmatpush1.msra.mxu0 0.0
        %615 = vmatprep.subr.mxu0 0.0
        %616 = vmatpush1.msra.mxu0 0.0
        %617 = vmatprep.subr.mxu0 0.0
        %618 = vmatpush1.msra.mxu0 0.0
        %619 = vmatprep.subr.mxu0 0.0
        %620 = vmatpush1.msra.mxu0 0.0
        %621 = vmatprep.subr.mxu0 0.0
        %622 = vmatpush1.msra.mxu0 0.0
        %623 = vmatprep.mubr.f32.mxu0 0.0
        %624 = vmatmul.mubr.f32.gmra.mrb[0].mxu0 %v554
        %v625 = vpop.f32.mrb[0].mxu0
        %v626 = vadd.f32 0.0, %v625
        %v627 = vpop.f32.mrb[0].mxu0
        %628 = vmatprep.mubr.f32.mxu0 0.0
        %629 = vmatmul.mubr.f32.gmra.mrb[0].mxu0 %v557
        %v630 = vpop.f32.mrb[0].mxu0
        %v631 = vadd.f32 0.0, %v630
        %v632 = vpop.f32.mrb[0].mxu0
        %633 = vdwg.mxu0
        %v635 = vsel %vm552, %v548, 0
        %v638 = vsel %vm552, %v549, 0
        %640 = vmatprep.subr.mxu0 0.0
        %641 = vmatpush1.msra.mxu0 %v536
        %642 = vmatprep.subr.mxu0 0.0
        %643 = vmatpush1.msra.mxu0 %v537
        %644 = vmatprep.subr.mxu0 0.0
        %645 = vmatpush1.msra.mxu0 0.0
        %646 = vmatprep.subr.mxu0 0.0
        %647 = vmatpush1.msra.mxu0 0.0
        %648 = vmatprep.subr.mxu0 0.0
        %649 = vmatpush1.msra.mxu0 0.0
        %650 = vmatprep.subr.mxu0 0.0
        %651 = vmatpush1.msra.mxu0 0.0
        %652 = vmatprep.subr.mxu0 0.0
        %653 = vmatpush1.msra.mxu0 0.0
        %654 = vmatprep.subr.mxu0 0.0
        %655 = vmatpush1.msra.mxu0 0.0
        %656 = vmatprep.subr.mxu0 0.0
        %657 = vmatpush1.msra.mxu0 0.0
        %658 = vmatprep.subr.mxu0 0.0
        %659 = vmatpush1.msra.mxu0 0.0
        %660 = vmatprep.subr.mxu0 0.0
        %661 = vmatpush1.msra.mxu0 0.0
        %662 = vmatprep.subr.mxu0 0.0
        %663 = vmatpush1.msra.mxu0 0.0
        %664 = vmatprep.subr.mxu0 0.0
        %665 = vmatpush1.msra.mxu0 0.0
        %666 = vmatprep.subr.mxu0 0.0
        %667 = vmatpush1.msra.mxu0 0.0
        %668 = vmatprep.subr.mxu0 0.0
        %669 = vmatpush1.msra.mxu0 0.0
        %670 = vmatprep.subr.mxu0 0.0
        %671 = vmatpush1.msra.mxu0 0.0
        %672 = vmatprep.subr.mxu0 0.0
        %673 = vmatpush1.msra.mxu0 0.0
        %674 = vmatprep.subr.mxu0 0.0
        %675 = vmatpush1.msra.mxu0 0.0
        %676 = vmatprep.subr.mxu0 0.0
        %677 = vmatpush1.msra.mxu0 0.0
        %678 = vmatprep.subr.mxu0 0.0
        %679 = vmatpush1.msra.mxu0 0.0
        %680 = vmatprep.subr.mxu0 0.0
        %681 = vmatpush1.msra.mxu0 0.0
        %682 = vmatprep.subr.mxu0 0.0
        %683 = vmatpush1.msra.mxu0 0.0
        %684 = vmatprep.subr.mxu0 0.0
        %685 = vmatpush1.msra.mxu0 0.0
        %686 = vmatprep.subr.mxu0 0.0
        %687 = vmatpush1.msra.mxu0 0.0
        %688 = vmatprep.subr.mxu0 0.0
        %689 = vmatpush1.msra.mxu0 0.0
        %690 = vmatprep.subr.mxu0 0.0
        %691 = vmatpush1.msra.mxu0 0.0
        %692 = vmatprep.subr.mxu0 0.0
        %693 = vmatpush1.msra.mxu0 0.0
        %694 = vmatprep.subr.mxu0 0.0
        %695 = vmatpush1.msra.mxu0 0.0
        %696 = vmatprep.subr.mxu0 0.0
        %697 = vmatpush1.msra.mxu0 0.0
        %698 = vmatprep.subr.mxu0 0.0
        %699 = vmatpush1.msra.mxu0 0.0
        %700 = vmatprep.subr.mxu0 0.0
        %701 = vmatpush1.msra.mxu0 0.0
        %702 = vmatprep.subr.mxu0 0.0
        %703 = vmatpush1.msra.mxu0 0.0
        %704 = vmatprep.mubr.f32.mxu0 0.0
        %705 = vmatmul.mubr.f32.gmra.mrb[0].mxu0 %v635
        %v706 = vpop.f32.mrb[0].mxu0
        %v707 = vadd.f32 %v626, %v706
        %v708 = vpop.f32.mrb[0].mxu0
        %709 = vmatprep.mubr.f32.mxu0 0.0
        %710 = vmatmul.mubr.f32.gmra.mrb[0].mxu0 %v638
        %v711 = vpop.f32.mrb[0].mxu0
        %v712 = vadd.f32 %v631, %v711
        %v713 = vpop.f32.mrb[0].mxu0
        %714 = vdwg.mxu0
        %v715 = vadd.f32 %v546, %v707
        %v716 = vadd.f32 %v547, %v712
        %vm717 = vcmask 261120
        %718 = vst.msk [vmem:[#allocation3] sm:$0xff] %vm717, %v715
        %719 = vst.msk [vmem:[#allocation3 + $0x8] sm:$0xff] %vm717, %v716
        // Predicated region
        $region81: #{tpu_custom_call.1} parent=67 // pred_check
          %p720 = pneg %p510
        $region82: #{tpu_custom_call.1} parent=67 // pred_check_branch
          %722 = sbr.rel (%p720) target = $region84
        $region83: #{tpu_custom_call.1} parent=67 // pred_region
          %v723 = vld [vmem:[#allocation3] sm:$0xff]
          %v724 = vld [vmem:[#allocation3 + $0x8] sm:$0xff]
          %v725 = vld [vmem:[%s439] sm:$0xff]
          %v726 = vld [vmem:[%s439 + $0x8] sm:$0xff]
          %v727 = vld [vmem:[%s439 + $0x10] sm:$0xff]
          %v728 = vld [vmem:[%s439 + $0x18] sm:$0xff]
          %v729 = vld [vmem:[%s508] sm:$0x1]
          %v731 = vlaneseq
          %v732 = vshrl.u32 %v731, 7
          %v733 = vsub.s32 0, %v732
          %v734 = vrot.slane %v729, %v733
          %v737 = vsel %vm717, %v723, 0
          %v740 = vsel %vm717, %v724, 0
          %742 = vmatprep.subr.mxu0 0.0
          %743 = vmatpush1.msra.mxu0 %v725
          %744 = vmatprep.subr.mxu0 0.0
          %745 = vmatpush1.msra.mxu0 %v726
          %746 = vmatprep.subr.mxu0 0.0
          %747 = vmatpush1.msra.mxu0 %v727
          %748 = vmatprep.subr.mxu0 0.0
          %749 = vmatpush1.msra.mxu0 %v728
          %750 = vmatprep.subr.mxu0 0.0
          %751 = vmatpush1.msra.mxu0 0.0
          %752 = vmatprep.subr.mxu0 0.0
          %753 = vmatpush1.msra.mxu0 0.0
          %754 = vmatprep.subr.mxu0 0.0
          %755 = vmatpush1.msra.mxu0 0.0
          %756 = vmatprep.subr.mxu0 0.0
          %757 = vmatpush1.msra.mxu0 0.0
          %758 = vmatprep.subr.mxu0 0.0
          %759 = vmatpush1.msra.mxu0 0.0
          %760 = vmatprep.subr.mxu0 0.0
          %761 = vmatpush1.msra.mxu0 0.0
          %762 = vmatprep.subr.mxu0 0.0
          %763 = vmatpush1.msra.mxu0 0.0
          %764 = vmatprep.subr.mxu0 0.0
          %765 = vmatpush1.msra.mxu0 0.0
          %766 = vmatprep.subr.mxu0 0.0
          %767 = vmatpush1.msra.mxu0 0.0
          %768 = vmatprep.subr.mxu0 0.0
          %769 = vmatpush1.msra.mxu0 0.0
          %770 = vmatprep.subr.mxu0 0.0
          %771 = vmatpush1.msra.mxu0 0.0
          %772 = vmatprep.subr.mxu0 0.0
          %773 = vmatpush1.msra.mxu0 0.0
          %774 = vmatprep.subr.mxu0 0.0
          %775 = vmatpush1.msra.mxu0 0.0
          %776 = vmatprep.subr.mxu0 0.0
          %777 = vmatpush1.msra.mxu0 0.0
          %778 = vmatprep.subr.mxu0 0.0
          %779 = vmatpush1.msra.mxu0 0.0
          %780 = vmatprep.subr.mxu0 0.0
          %781 = vmatpush1.msra.mxu0 0.0
          %782 = vmatprep.subr.mxu0 0.0
          %783 = vmatpush1.msra.mxu0 0.0
          %784 = vmatprep.subr.mxu0 0.0
          %785 = vmatpush1.msra.mxu0 0.0
          %786 = vmatprep.subr.mxu0 0.0
          %787 = vmatpush1.msra.mxu0 0.0
          %788 = vmatprep.subr.mxu0 0.0
          %789 = vmatpush1.msra.mxu0 0.0
          %790 = vmatprep.subr.mxu0 0.0
          %791 = vmatpush1.msra.mxu0 0.0
          %792 = vmatprep.subr.mxu0 0.0
          %793 = vmatpush1.msra.mxu0 0.0
          %794 = vmatprep.subr.mxu0 0.0
          %795 = vmatpush1.msra.mxu0 0.0
          %796 = vmatprep.subr.mxu0 0.0
          %797 = vmatpush1.msra.mxu0 0.0
          %798 = vmatprep.subr.mxu0 0.0
          %799 = vmatpush1.msra.mxu0 0.0
          %800 = vmatprep.subr.mxu0 0.0
          %801 = vmatpush1.msra.mxu0 0.0
          %802 = vmatprep.subr.mxu0 0.0
          %803 = vmatpush1.msra.mxu0 0.0
          %804 = vmatprep.subr.mxu0 0.0
          %805 = vmatpush1.msra.mxu0 0.0
          %806 = vmatprep.mubr.f32.mxu0 0.0
          %807 = vmatmul.mubr.f32.gmra.mrb[0].mxu0 %v737
          %v808 = vpop.f32.mrb[0].mxu0
          %v809 = vadd.f32 %v734, %v808
          %v810 = vpop.f32.mrb[0].mxu0
          %811 = vmatprep.mubr.f32.mxu0 0.0
          %812 = vmatmul.mubr.f32.gmra.mrb[0].mxu0 %v740
          %v813 = vpop.f32.mrb[0].mxu0
          %v814 = vadd.f32 %v734, %v813
          %v815 = vpop.f32.mrb[0].mxu0
          %816 = vdwg.mxu0
          %817 = vst.msk [vmem:[#allocation2] sm:$0xff] %vm717, %v809
          %818 = vst.msk [vmem:[#allocation2 + $0x8] sm:$0xff] %vm717, %v814
        $region84: #{tpu_custom_call.1} parent=67 // pred_fallthru
          _
        %p819 = scmp.eq.s32.totalorder %s32, 5
        %p820 = pnand %p819, %p510
        %p821 = pneg %p820
        // Predicated region
        $region85: #{tpu_custom_call.1} parent=67 // pred_check
          _
        $region86: #{tpu_custom_call.1} parent=67 // pred_check_branch
          %823 = sbr.rel (%p820) target = $region88
        $region87: #{tpu_custom_call.1} parent=67 // pred_region
          %v824 = vld [vmem:[#allocation2] sm:$0xff]
          %v825 = vld [vmem:[#allocation2 + $0x8] sm:$0xff]
          %v826 = vld [vmem:[%s7] sm:$0xff]
          %v827 = vld [vmem:[%s7 + $0x8] sm:$0xff]
          %v828 = vld [vmem:[%s7 + $0x10] sm:$0xff]
          %v829 = vld [vmem:[%s7 + $0x18] sm:$0xff]
          %v830 = vld [vmem:[%s8] sm:$0x1]
          %v832 = vlaneseq
          %v833 = vshrl.u32 %v832, 7
          %v834 = vsub.s32 0, %v833
          %v835 = vrot.slane %v830, %v834
          %v838 = vsel %vm717, %v824, 0
          %v841 = vsel %vm717, %v825, 0
          %843 = vmatprep.subr.mxu0 0.0
          %844 = vmatpush1.msra.mxu0 %v826
          %845 = vmatprep.subr.mxu0 0.0
          %846 = vmatpush1.msra.mxu0 %v827
          %847 = vmatprep.subr.mxu0 0.0
          %848 = vmatpush1.msra.mxu0 %v828
          %849 = vmatprep.subr.mxu0 0.0
          %850 = vmatpush1.msra.mxu0 %v829
          %851 = vmatprep.subr.mxu0 0.0
          %852 = vmatpush1.msra.mxu0 0.0
          %853 = vmatprep.subr.mxu0 0.0
          %854 = vmatpush1.msra.mxu0 0.0
          %855 = vmatprep.subr.mxu0 0.0
          %856 = vmatpush1.msra.mxu0 0.0
          %857 = vmatprep.subr.mxu0 0.0
          %858 = vmatpush1.msra.mxu0 0.0
          %859 = vmatprep.subr.mxu0 0.0
          %860 = vmatpush1.msra.mxu0 0.0
          %861 = vmatprep.subr.mxu0 0.0
          %862 = vmatpush1.msra.mxu0 0.0
          %863 = vmatprep.subr.mxu0 0.0
          %864 = vmatpush1.msra.mxu0 0.0
          %865 = vmatprep.subr.mxu0 0.0
          %866 = vmatpush1.msra.mxu0 0.0
          %867 = vmatprep.subr.mxu0 0.0
          %868 = vmatpush1.msra.mxu0 0.0
          %869 = vmatprep.subr.mxu0 0.0
          %870 = vmatpush1.msra.mxu0 0.0
          %871 = vmatprep.subr.mxu0 0.0
          %872 = vmatpush1.msra.mxu0 0.0
          %873 = vmatprep.subr.mxu0 0.0
          %874 = vmatpush1.msra.mxu0 0.0
          %875 = vmatprep.subr.mxu0 0.0
          %876 = vmatpush1.msra.mxu0 0.0
          %877 = vmatprep.subr.mxu0 0.0
          %878 = vmatpush1.msra.mxu0 0.0
          %879 = vmatprep.subr.mxu0 0.0
          %880 = vmatpush1.msra.mxu0 0.0
          %881 = vmatprep.subr.mxu0 0.0
          %882 = vmatpush1.msra.mxu0 0.0
          %883 = vmatprep.subr.mxu0 0.0
          %884 = vmatpush1.msra.mxu0 0.0
          %885 = vmatprep.subr.mxu0 0.0
          %886 = vmatpush1.msra.mxu0 0.0
          %887 = vmatprep.subr.mxu0 0.0
          %888 = vmatpush1.msra.mxu0 0.0
          %889 = vmatprep.subr.mxu0 0.0
          %890 = vmatpush1.msra.mxu0 0.0
          %891 = vmatprep.subr.mxu0 0.0
          %892 = vmatpush1.msra.mxu0 0.0
          %893 = vmatprep.subr.mxu0 0.0
          %894 = vmatpush1.msra.mxu0 0.0
          %895 = vmatprep.subr.mxu0 0.0
          %896 = vmatpush1.msra.mxu0 0.0
          %897 = vmatprep.subr.mxu0 0.0
          %898 = vmatpush1.msra.mxu0 0.0
          %899 = vmatprep.subr.mxu0 0.0
          %900 = vmatpush1.msra.mxu0 0.0
          %901 = vmatprep.subr.mxu0 0.0
          %902 = vmatpush1.msra.mxu0 0.0
          %903 = vmatprep.subr.mxu0 0.0
          %904 = vmatpush1.msra.mxu0 0.0
          %905 = vmatprep.subr.mxu0 0.0
          %906 = vmatpush1.msra.mxu0 0.0
          %907 = vmatprep.mubr.f32.mxu0 0.0
          %908 = vmatmul.mubr.f32.gmra.mrb[0].mxu0 %v838
          %v909 = vpop.f32.mrb[0].mxu0
          %v910 = vadd.f32 %v835, %v909
          %v911 = vpop.f32.mrb[0].mxu0
          %912 = vmatprep.mubr.f32.mxu0 0.0
          %913 = vmatmul.mubr.f32.gmra.mrb[0].mxu0 %v841
          %v914 = vpop.f32.mrb[0].mxu0
          %v915 = vadd.f32 %v835, %v914
          %v916 = vpop.f32.mrb[0].mxu0
          %917 = vdwg.mxu0
          %v918 = vmax.f32 %v910, 0.0
          %v919 = vmax.f32 %v915, 0.0
          %v920 = vand.u32 2147483647, %v910
          %v921 = vand.u32 2147483647, %v915
          %v922 = vsub.f32 0.0, %v920
          %v923 = vsub.f32 0.0, %v921
          %v924 = vmul.f32 %v922, 1.442695
          %v925 = vpow.pop %v924
          %v926 = vmul.f32 %v923, 1.442695
          %v927 = vpow.pop %v926
          %v928 = vadd.f32 %v925, 1.0
          %v929 = vadd.f32 %v927, 1.0
          %v930 = vlog2.pop %v928
          %v931 = vmul.f32 %v930, 0.6931472
          %v932 = vlog2.pop %v929
          %v933 = vmul.f32 %v932, 0.6931472
          %v934 = vadd.f32 %v918, %v931
          %v935 = vadd.f32 %v919, %v933
          %v936 = vsub.f32 %v934, 0.6931472
          %v937 = vsub.f32 %v935, 0.6931472
          %v938 = vld [vmem:[%s9] sm:$0xff]
          %v939 = vld [vmem:[%s9 + $0x8] sm:$0xff]
          %v940 = vld [vmem:[#allocation4] sm:$0x1]
          %v942 = vlaneseq
          %v943 = vshrl.u32 %v942, 7
          %v944 = vsub.s32 0, %v943
          %v945 = vrot.slane %v940, %v944
          %v948 = vsel %vm552, %v936, 0
          %v951 = vsel %vm552, %v937, 0
          %953 = vmatprep.subr.mxu0 0.0
          %954 = vmatpush1.msra.mxu0 %v938
          %955 = vmatprep.subr.mxu0 0.0
          %956 = vmatpush1.msra.mxu0 %v939
          %957 = vmatprep.subr.mxu0 0.0
          %958 = vmatpush1.msra.mxu0 0.0
          %959 = vmatprep.subr.mxu0 0.0
          %960 = vmatpush1.msra.mxu0 0.0
          %961 = vmatprep.subr.mxu0 0.0
          %962 = vmatpush1.msra.mxu0 0.0
          %963 = vmatprep.subr.mxu0 0.0
          %964 = vmatpush1.msra.mxu0 0.0
          %965 = vmatprep.subr.mxu0 0.0
          %966 = vmatpush1.msra.mxu0 0.0
          %967 = vmatprep.subr.mxu0 0.0
          %968 = vmatpush1.msra.mxu0 0.0
          %969 = vmatprep.subr.mxu0 0.0
          %970 = vmatpush1.msra.mxu0 0.0
          %971 = vmatprep.subr.mxu0 0.0
          %972 = vmatpush1.msra.mxu0 0.0
          %973 = vmatprep.subr.mxu0 0.0
          %974 = vmatpush1.msra.mxu0 0.0
          %975 = vmatprep.subr.mxu0 0.0
          %976 = vmatpush1.msra.mxu0 0.0
          %977 = vmatprep.subr.mxu0 0.0
          %978 = vmatpush1.msra.mxu0 0.0
          %979 = vmatprep.subr.mxu0 0.0
          %980 = vmatpush1.msra.mxu0 0.0
          %981 = vmatprep.subr.mxu0 0.0
          %982 = vmatpush1.msra.mxu0 0.0
          %983 = vmatprep.subr.mxu0 0.0
          %984 = vmatpush1.msra.mxu0 0.0
          %985 = vmatprep.subr.mxu0 0.0
          %986 = vmatpush1.msra.mxu0 0.0
          %987 = vmatprep.subr.mxu0 0.0
          %988 = vmatpush1.msra.mxu0 0.0
          %989 = vmatprep.subr.mxu0 0.0
          %990 = vmatpush1.msra.mxu0 0.0
          %991 = vmatprep.subr.mxu0 0.0
          %992 = vmatpush1.msra.mxu0 0.0
          %993 = vmatprep.subr.mxu0 0.0
          %994 = vmatpush1.msra.mxu0 0.0
          %995 = vmatprep.subr.mxu0 0.0
          %996 = vmatpush1.msra.mxu0 0.0
          %997 = vmatprep.subr.mxu0 0.0
          %998 = vmatpush1.msra.mxu0 0.0
          %999 = vmatprep.subr.mxu0 0.0
          %1000 = vmatpush1.msra.mxu0 0.0
          %1001 = vmatprep.subr.mxu0 0.0
          %1002 = vmatpush1.msra.mxu0 0.0
          %1003 = vmatprep.subr.mxu0 0.0
          %1004 = vmatpush1.msra.mxu0 0.0
          %1005 = vmatprep.subr.mxu0 0.0
          %1006 = vmatpush1.msra.mxu0 0.0
          %1007 = vmatprep.subr.mxu0 0.0
          %1008 = vmatpush1.msra.mxu0 0.0
          %1009 = vmatprep.subr.mxu0 0.0
          %1010 = vmatpush1.msra.mxu0 0.0
          %1011 = vmatprep.subr.mxu0 0.0
          %1012 = vmatpush1.msra.mxu0 0.0
          %1013 = vmatprep.subr.mxu0 0.0
          %1014 = vmatpush1.msra.mxu0 0.0
          %1015 = vmatprep.subr.mxu0 0.0
          %1016 = vmatpush1.msra.mxu0 0.0
          %1017 = vmatprep.mubr.f32.mxu0 0.0
          %1018 = vmatmul.mubr.f32.gmra.mrb[0].mxu0 %v948
          %v1019 = vpop.f32.mrb[0].mxu0
          %v1020 = vadd.f32 %v945, %v1019
          %v1021 = vpop.f32.mrb[0].mxu0
          %1022 = vmatprep.mubr.f32.mxu0 0.0
          %1023 = vmatmul.mubr.f32.gmra.mrb[0].mxu0 %v951
          %v1024 = vpop.f32.mrb[0].mxu0
          %v1025 = vadd.f32 %v945, %v1024
          %v1026 = vpop.f32.mrb[0].mxu0
          %1027 = vdwg.mxu0
          %v1028 = vld [vmem:[%s11] sm:$0x3]
          %v1030 = vsel %vm552, %v1028, 0
          %1032 = vmatprep.subr.mxu0 0.0
          %1033 = vmatpush1.msra.mxu0 %v1020
          %1034 = vmatprep.subr.mxu0 0.0
          %1035 = vmatpush1.msra.mxu0 %v1025
          %1036 = vmatprep.subr.mxu0 0.0
          %1037 = vmatpush1.msra.mxu0 0.0
          %1038 = vmatprep.subr.mxu0 0.0
          %1039 = vmatpush1.msra.mxu0 0.0
          %1040 = vmatprep.subr.mxu0 0.0
          %1041 = vmatpush1.msra.mxu0 0.0
          %1042 = vmatprep.subr.mxu0 0.0
          %1043 = vmatpush1.msra.mxu0 0.0
          %1044 = vmatprep.subr.mxu0 0.0
          %1045 = vmatpush1.msra.mxu0 0.0
          %1046 = vmatprep.subr.mxu0 0.0
          %1047 = vmatpush1.msra.mxu0 0.0
          %1048 = vmatprep.subr.mxu0 0.0
          %1049 = vmatpush1.msra.mxu0 0.0
          %1050 = vmatprep.subr.mxu0 0.0
          %1051 = vmatpush1.msra.mxu0 0.0
          %1052 = vmatprep.subr.mxu0 0.0
          %1053 = vmatpush1.msra.mxu0 0.0
          %1054 = vmatprep.subr.mxu0 0.0
          %1055 = vmatpush1.msra.mxu0 0.0
          %1056 = vmatprep.subr.mxu0 0.0
          %1057 = vmatpush1.msra.mxu0 0.0
          %1058 = vmatprep.subr.mxu0 0.0
          %1059 = vmatpush1.msra.mxu0 0.0
          %1060 = vmatprep.subr.mxu0 0.0
          %1061 = vmatpush1.msra.mxu0 0.0
          %1062 = vmatprep.subr.mxu0 0.0
          %1063 = vmatpush1.msra.mxu0 0.0
          %1064 = vmatprep.subr.mxu0 0.0
          %1065 = vmatpush1.msra.mxu0 0.0
          %1066 = vmatprep.subr.mxu0 0.0
          %1067 = vmatpush1.msra.mxu0 0.0
          %1068 = vmatprep.subr.mxu0 0.0
          %1069 = vmatpush1.msra.mxu0 0.0
          %1070 = vmatprep.subr.mxu0 0.0
          %1071 = vmatpush1.msra.mxu0 0.0
          %1072 = vmatprep.subr.mxu0 0.0
          %1073 = vmatpush1.msra.mxu0 0.0
          %1074 = vmatprep.subr.mxu0 0.0
          %1075 = vmatpush1.msra.mxu0 0.0
          %1076 = vmatprep.subr.mxu0 0.0
          %1077 = vmatpush1.msra.mxu0 0.0
          %1078 = vmatprep.subr.mxu0 0.0
          %1079 = vmatpush1.msra.mxu0 0.0
          %1080 = vmatprep.subr.mxu0 0.0
          %1081 = vmatpush1.msra.mxu0 0.0
          %1082 = vmatprep.subr.mxu0 0.0
          %1083 = vmatpush1.msra.mxu0 0.0
          %1084 = vmatprep.subr.mxu0 0.0
          %1085 = vmatpush1.msra.mxu0 0.0
          %1086 = vmatprep.subr.mxu0 0.0
          %1087 = vmatpush1.msra.mxu0 0.0
          %1088 = vmatprep.subr.mxu0 0.0
          %1089 = vmatpush1.msra.mxu0 0.0
          %1090 = vmatprep.subr.mxu0 0.0
          %1091 = vmatpush1.msra.mxu0 0.0
          %1092 = vmatprep.subr.mxu0 0.0
          %1093 = vmatpush1.msra.mxu0 0.0
          %1094 = vmatprep.subr.mxu0 0.0
          %1095 = vmatpush1.msra.mxu0 0.0
          %1096 = vmatprep.mubr.f32.mxu0 0.0
          %1097 = vmatmul.mubr.f32.gmra.mrb[0].mxu0 %v1030
          %v1098 = vpop.f32.mrb[0].mxu0
          %v1099 = vadd.f32 0.0, %v1098
          %v1100 = vpop.f32.mrb[0].mxu0
          %1101 = vdwg.mxu0
          %vm1102 = vcmask 1024
          %1103 = vst.msk [vmem:[%s12] sm:$0x3] %vm1102, %v1099
        $region88: #{tpu_custom_call.1} parent=67 // pred_fallthru
          _
        // Predicated region
        $region89: #{tpu_custom_call.1} parent=67 // pred_check
          %p1104 = pneg %p335
        $region90: #{tpu_custom_call.1} parent=67 // pred_check_branch
          %1106 = sbr.rel (%p1104) target = $region92
        $region91: #{tpu_custom_call.1} parent=67 // pred_region
          _
        $region92: #{tpu_custom_call.1} parent=67 // pred_fallthru
          _
        // Predicated region
        $region93: #{tpu_custom_call.1} parent=67 // pred_check
          %p1107 = pneg %p335
        $region94: #{tpu_custom_call.1} parent=67 // pred_check_branch
          %1109 = sbr.rel (%p1107) target = $region96
        $region95: #{tpu_custom_call.1} parent=67 // pred_region
          _
        $region96: #{tpu_custom_call.1} parent=67 // pred_fallthru
          _
      $region68: #{tpu_custom_call.1} parent=5 // pred_fallthru
        _
      %p1110 = scmp.le.s32.totalorder 2, %s23
      // Predicated region
      $region97: #{tpu_custom_call.1} parent=5 // pred_check
        %p1111 = pneg %p1110
      $region98: #{tpu_custom_call.1} parent=5 // pred_check_branch
        %1113 = sbr.rel (%p1111) target = $region100
      $region99: #{tpu_custom_call.1} parent=5 // pred_region
        %s1114 = ssub.s32 %s23, 2
      $region100: #{tpu_custom_call.1} parent=5 // pred_fallthru
        _
    $region6: #{tpu_custom_call.1} parent=1 // loop_footer
      %s27 = sadd.s32 1, %s23
    $region7: #{tpu_custom_call.1} parent=1 // loop_footer_branch
      %22 = sbr.rel target = $region3
    $region8: #{tpu_custom_call.1} parent=1 // loop_exit
      _
    %1115 = vsyncpa [#allocation6], 1
    %s1116 = scalar_lea.sflag [#allocation6], 1
    %1117 = vsyncpa %s1116, 1

</llo_original>
